<compile_context>
chip_gen: v7x
topology: tpu7x:2x2x1
jax: 0.10.0
libtpu: 0.0.40
codegen_flags: <defaults>
</compile_context>

<pallas_src>
import math
from functools import partial

import jax
import jax.numpy as jnp
from jax.experimental import pallas as pl
from jax.experimental.pallas import tpu as pltpu


# ----------------------------- Pallas kernel ------------------------------ #

def fused_encoder_kernel(x_ref, mask_ref,
                         wqkv_ref, bqkv_ref, wo_ref, bo_ref,
                         w1_ref, b1_ref, w2_ref, b2_ref,
                         gamma_ref, beta_ref, out_ref,
                         *, heads, attn_dim):
    eps = 1e-5                           # torch nn.LayerNorm default
    H, d = heads, attn_dim
    l = pl.program_id(1)

    # Layer 0: seed the resident output block (the activation carry) from x.
    # out_ref's block index only depends on the batch coordinate, so it stays
    # in VMEM across the (inner, "arbitrary") layer axis.
    @pl.when(l == 0)
    def _():
        out_ref[...] = x_ref[...]

    Bt, S, D = out_ref.shape
    x = out_ref[...].reshape(Bt * S, D)                   # (Bt*S, D) f32 carry
    xb = x.astype(jnp.bfloat16)

    # ---- fused QKV projection: one lane-dense (Bt*S, D) @ (D, 3D) matmul ----
    # 1/sqrt(d) is already folded into the Q columns of wqkv / bqkv.
    qkv = jnp.dot(xb, wqkv_ref[...], preferred_element_type=jnp.float32)
    qkv = qkv + bqkv_ref[...]                             # + (1, 3D)

    # Padding mask, masked_fill semantics: (Bt, 1, S) broadcast over queries.
    keep = mask_ref[...] != 0.0

    # ---- per-head attention (static lane slices of the fused QKV output) ----
    ctx_heads = []
    for h in range(H):
        qh = qkv[:, h * d:(h + 1) * d].reshape(Bt, S, d).astype(jnp.bfloat16)
        kh = qkv[:, D + h * d:D + (h + 1) * d].reshape(Bt, S, d).astype(jnp.bfloat16)
        vh = qkv[:, 2 * D + h * d:2 * D + (h + 1) * d].reshape(Bt, S, d).astype(jnp.bfloat16)

        s = jnp.einsum("bqd,bkd->bqk", qh, kh,
                       preferred_element_type=jnp.float32)        # (Bt, S, S)
        s = jnp.where(keep, s, -1e10)                             # masked_fill
        s = s - jnp.max(s, axis=-1, keepdims=True)
        p = jnp.exp(s)
        p = p * pl.reciprocal(jnp.sum(p, axis=-1, keepdims=True), approx=True)
        # attention dropout is identity at inference time
        ctx_heads.append(jnp.einsum("bqk,bkd->bqd", p.astype(jnp.bfloat16), vh,
                                    preferred_element_type=jnp.float32))

    # Head merge (lane-dim concat) + single full-D-contraction output proj.
    ctx = jnp.concatenate(ctx_heads, axis=-1).reshape(Bt * S, D)
    attn = jnp.dot(ctx.astype(jnp.bfloat16), wo_ref[...],
                   preferred_element_type=jnp.float32) + bo_ref[...]

    gamma = gamma_ref[...]                                # (1, D)
    beta = beta_ref[...]                                  # (1, D)

    def layer_norm(val):                                  # f32 math
        mu = jnp.mean(val, axis=-1, keepdims=True)
        var = jnp.mean(jnp.square(val - mu), axis=-1, keepdims=True)
        return (val - mu) * jax.lax.rsqrt(var + eps) * gamma + beta

    # residual dropout is identity at inference time
    x1 = layer_norm(x + attn)                             # (Bt*S, D)

    # ---- position-wise feed forward (bf16 matmuls, f32 accumulation) ----
    h1 = jnp.dot(x1.astype(jnp.bfloat16), w1_ref[...],
                 preferred_element_type=jnp.float32) + b1_ref[...]
    h1 = jnp.maximum(h1, 0.0)                             # relu
    ff = jnp.dot(h1.astype(jnp.bfloat16), w2_ref[...],
                 preferred_element_type=jnp.float32) + b2_ref[...]
    x2 = layer_norm(x1 + ff)

    out_ref[...] = x2.reshape(Bt, S, D).astype(out_ref.dtype)   # carry / final


# ------------------------------- wrapper ----------------------------------- #

def _vmem_limit_bytes():
    """Per-generation scoped-VMEM limit: raise from the small defaults
    (16 MiB on v5e, 32 MiB on v6e/v7x) toward physical capacity."""
    try:
        cap = int(pltpu.get_tpu_info().vmem_capacity_bytes)
        return min(int(cap * 0.85), 100 * 1024 * 1024)
    except Exception:
        return 32 * 1024 * 1024


def _pick_batch_tile(B, S, D, F, vmem_limit):
    """Largest divisor of B whose per-block working set fits a VMEM budget."""
    weight_bytes = 2 * 2 * (4 * D * D + 2 * D * F)   # double-buffered bf16 weights
    budget = int(vmem_limit * 0.6)
    for bt in range(B, 0, -1):
        if B % bt:
            continue
        act = 4 * bt * S * D * 4                     # x + out blocks (double-buffered), f32
        tmp = bt * S * (3 * D + D + F + D) * 4       # qkv + ctx + ffn hidden + attn, f32
        scores = 2 * bt * S * S * 4                  # one head's scores + probs, f32
        if weight_bytes + act + tmp + scores <= budget:
            return bt
    return 1


def encoder_stack_pallas(x, mask, stacked, heads):
    B, S, D = x.shape
    L = stacked["wqkv"].shape[0]
    F = stacked["w1"].shape[-1]
    d = D // heads

    vmem_limit = _vmem_limit_bytes()
    Bt = _pick_batch_tile(B, S, D, F, vmem_limit)
    nb = B // Bt

    def wspec(shape):
        n = len(shape)
        return pl.BlockSpec((None,) + shape, lambda b, l, n=n: (l,) + (0,) * n)

    in_specs = [
        # x is only read at layer 0 (see TODO about single-buffering / aliasing)
        pl.BlockSpec((Bt, S, D), lambda b, l: (b, 0, 0)),      # x
        pl.BlockSpec((Bt, 1, S), lambda b, l: (b, 0, 0)),      # mask
        wspec((D, 3 * D)), wspec((1, 3 * D)),                  # wqkv, bqkv
        wspec((D, D)), wspec((1, D)),                          # wo, bo
        wspec((D, F)), wspec((1, F)),                          # w1, b1
        wspec((F, D)), wspec((1, D)),                          # w2, b2
        wspec((1, D)), wspec((1, D)),                          # gamma, beta
    ]

    kernel = partial(fused_encoder_kernel, heads=heads, attn_dim=d)
    return pl.pallas_call(
        kernel,
        out_shape=jax.ShapeDtypeStruct((B, S, D), jnp.float32),
        grid=(nb, L),
        in_specs=in_specs,
        out_specs=pl.BlockSpec((Bt, S, D), lambda b, l: (b, 0, 0)),
        compiler_params=pltpu.CompilerParams(
            dimension_semantics=("parallel", "arbitrary"),
            vmem_limit_bytes=vmem_limit),
    )(x, mask,
      stacked["wqkv"], stacked["bqkv"], stacked["wo"], stacked["bo"],
      stacked["w1"], stacked["b1"], stacked["w2"], stacked["b2"],
      stacked["gamma"], stacked["beta"])


# ------------------------------- glue (JAX) -------------------------------- #

def positional_embedding(max_len, d_model):
    position = jnp.arange(0.0, max_len)[:, None]
    div_term = jnp.exp(jnp.arange(0.0, d_model, 2) * -(math.log(10000.0) / d_model))
    pe = jnp.zeros((max_len, d_model), jnp.float32)
    pe = pe.at[:, 0::2].set(jnp.sin(position * div_term))
    pe = pe.at[:, 1::2].set(jnp.cos(position * div_term))
    return pe


def init_params(key, vocab_size, D, heads, pf_dim, num_layers):
    keys = jax.random.split(key, 1 + num_layers)
    emb = jax.random.normal(keys[0], (vocab_size, D), jnp.float32) * 0.1

    def lin(k, fi, fo):
        kw, kb = jax.random.split(k)
        w = jax.random.normal(kw, (fi, fo), jnp.float32) * (1.0 / math.sqrt(fi))
        b = jax.random.normal(kb, (1, fo), jnp.float32) * 0.01
        return w, b

    layer_params = []
    for l in range(num_layers):
        ks = jax.random.split(keys[1 + l], 6)
        wq, bq = lin(ks[0], D, D)
        wk, bk = lin(ks[1], D, D)
        wv, bv = lin(ks[2], D, D)
        wo, bo = lin(ks[3], D, D)
        w1, b1 = lin(ks[4], D, pf_dim)
        w2, b2 = lin(ks[5], pf_dim, D)
        layer_params.append(dict(
            wq=wq, bq=bq, wk=wk, bk=bk, wv=wv, bv=bv, wo=wo, bo=bo,
            w1=w1, b1=b1, w2=w2, b2=b2,
            gamma=jnp.ones((1, D), jnp.float32),
            beta=jnp.zeros((1, D), jnp.float32),
        ))
    return emb, layer_params


def stack_layer_params(layer_params, heads):
    """Stack per-layer params on a leading layer axis; fuse Wq|Wk|Wv into one
    (D, 3D) weight and bq|bk|bv into one (1, 3D) row, fold 1/sqrt(d) into the
    Q columns, and cast matmul weights to bf16 (halves weight DMA / VMEM)."""
    D = layer_params[0]["wq"].shape[0]
    d = D // heads
    inv_scale = 1.0 / math.sqrt(d)
    bf = jnp.bfloat16

    def stack(name):
        return jnp.stack([p[name] for p in layer_params])

    wq = stack("wq") * inv_scale
    bq = stack("bq") * inv_scale
    wqkv = jnp.concatenate([wq, stack("wk"), stack("wv")], axis=-1)   # (L, D, 3D)
    bqkv = jnp.concatenate([bq, stack("bk"), stack("bv")], axis=-1)   # (L, 1, 3D)

    return dict(
        wqkv=wqkv.astype(bf), bqkv=bqkv,
        wo=stack("wo").astype(bf), bo=stack("bo"),
        w1=stack("w1").astype(bf), b1=stack("b1"),
        w2=stack("w2").astype(bf), b2=stack("b2"),
        gamma=stack("gamma"), beta=stack("beta"),
    )


def encoder_forward(src_tokens, emb, pos_embed, stacked, heads, padding_idx, D):
    B, S = src_tokens.shape
    mask = (src_tokens != padding_idx).astype(jnp.float32).reshape(B, 1, S)
    x = (emb[src_tokens] * math.sqrt(D) + pos_embed[:S][None, :, :]).astype(jnp.float32)
    # dropout on embeddings is identity at inference time
    return encoder_stack_pallas(x, mask, stacked, heads)


# ---------------------------- pure-JAX reference --------------------------- #
# Faithful f32 re-implementation of the torch module (masked_fill semantics).

def reference_layer(x, mask, p, heads):
    B, S, D = x.shape
    d = D // heads
    scale = math.sqrt(d)

    def dense(v, w, b):
        return jnp.einsum("bsi,io->bso", v, w) + b[0]

    q = dense(x, p["wq"], p["bq"]).reshape(B, S, heads, d).transpose(0, 2, 1, 3)
    k = dense(x, p["wk"], p["bk"]).reshape(B, S, heads, d).transpose(0, 2, 1, 3)
    v = dense(x, p["wv"], p["bv"]).reshape(B, S, heads, d).transpose(0, 2, 1, 3)
    e = jnp.einsum("bhqd,bhkd->bhqk", q, k) / scale
    e = jnp.where(mask[:, None, :, :] == 0, -1e10, e)
    a = jax.nn.softmax(e, axis=-1)
    o = jnp.einsum("bhqk,bhkd->bhqd", a, v).transpose(0, 2, 1, 3).reshape(B, S, D)
    o = dense(o, p["wo"], p["bo"])

    def ln(vv):
        mu = vv.mean(-1, keepdims=True)
        var = ((vv - mu) ** 2).mean(-1, keepdims=True)
        return (vv - mu) / jnp.sqrt(var + 1e-5) * p["gamma"][0] + p["beta"][0]

    x1 = ln(x + o)
    ff = dense(jnp.maximum(dense(x1, p["w1"], p["b1"]), 0.0), p["w2"], p["b2"])
    return ln(x1 + ff)


def reference_forward(src_tokens, emb, pos_embed, layer_params, heads, padding_idx, D):
    B, S = src_tokens.shape
    mask = (src_tokens != padding_idx).astype(jnp.float32).reshape(B, 1, S)
    x = emb[src_tokens] * math.sqrt(D) + pos_embed[:S][None, :, :]
    for p in layer_params:
        x = reference_layer(x, mask, p, heads)
    return x


# ---------------------------------- main ----------------------------------- #

if __name__ == "__main__":
    # Small shapes consistent with the module's forward
    VOCAB, PAD_IDX = 16, 0
    B, S, D, HEADS, PF_DIM, LAYERS, MAX_POS = 2, 8, 32, 4, 64, 2, 100

    key = jax.random.PRNGKey(0)
    k_tok, k_par = jax.random.split(key)

    src_tokens = jax.random.randint(k_tok, (B, S), 1, VOCAB)
    src_tokens = src_tokens.at[1, -3:].set(PAD_IDX)   # exercise padding mask

    emb, layer_params = init_params(k_par, VOCAB, D, HEADS, PF_DIM, LAYERS)
    pos_embed = positional_embedding(MAX_POS, D)
    stacked = stack_layer_params(layer_params, HEADS)

    out = encoder_forward(src_tokens, emb, pos_embed, stacked, HEADS, PAD_IDX, D)
    out = jax.block_until_ready(out)

    ref = reference_forward(src_tokens, emb, pos_embed, layer_params, HEADS, PAD_IDX, D)
    assert out.shape == (B, S, D)
    # Tolerance accounts for bf16 MXU operands in the kernel vs. the f32 reference.
    assert jnp.allclose(out, ref, atol=5e-2, rtol=5e-2), (
        f"Pallas output mismatch vs JAX reference; max abs err = "
        f"{float(jnp.max(jnp.abs(out - ref)))}")

    print("KERNEL_OK")
</pallas_src>

<mosaic_0001>
module attributes {stable_mosaic.version = 11 : i64} {
  func.func @fused_encoder_kernel(%arg0: i32, %arg1: i32, %arg2: memref<2x8x32xf32, #tpu.memory_space<vmem>>, %arg3: memref<2x1x8xf32, #tpu.memory_space<vmem>>, %arg4: memref<1x32x96xbf16, #tpu.memory_space<vmem>>, %arg5: memref<1x1x96xf32, #tpu.memory_space<vmem>>, %arg6: memref<1x32x32xbf16, #tpu.memory_space<vmem>>, %arg7: memref<1x1x32xf32, #tpu.memory_space<vmem>>, %arg8: memref<1x32x64xbf16, #tpu.memory_space<vmem>>, %arg9: memref<1x1x64xf32, #tpu.memory_space<vmem>>, %arg10: memref<1x64x32xbf16, #tpu.memory_space<vmem>>, %arg11: memref<1x1x32xf32, #tpu.memory_space<vmem>>, %arg12: memref<1x1x32xf32, #tpu.memory_space<vmem>>, %arg13: memref<1x1x32xf32, #tpu.memory_space<vmem>>, %arg14: memref<2x8x32xf32, #tpu.memory_space<vmem>>) attributes {dimension_semantics = [#tpu.dimension_semantics<parallel>, #tpu.dimension_semantics<arbitrary>], iteration_bounds = array<i64: 1, 2>, scalar_prefetch = 0 : i64, scratch_operands = 0 : i64, tpu.core_type = #tpu.core_type<tc>, window_params = [{transform_indices = @transform_0, window_bounds = array<i64: 2, 8, 32>}, {transform_indices = @transform_1, window_bounds = array<i64: 2, 1, 8>}, {transform_indices = @transform_2, window_bounds = array<i64: 1, 32, 96>}, {transform_indices = @transform_3, window_bounds = array<i64: 1, 1, 96>}, {transform_indices = @transform_4, window_bounds = array<i64: 1, 32, 32>}, {transform_indices = @transform_5, window_bounds = array<i64: 1, 1, 32>}, {transform_indices = @transform_6, window_bounds = array<i64: 1, 32, 64>}, {transform_indices = @transform_7, window_bounds = array<i64: 1, 1, 64>}, {transform_indices = @transform_8, window_bounds = array<i64: 1, 64, 32>}, {transform_indices = @transform_9, window_bounds = array<i64: 1, 1, 32>}, {transform_indices = @transform_10, window_bounds = array<i64: 1, 1, 32>}, {transform_indices = @transform_11, window_bounds = array<i64: 1, 1, 32>}, {transform_indices = @transform_12, window_bounds = array<i64: 2, 8, 32>}]} {
    %c0_i32 = arith.constant 0 : i32
    %0 = arith.cmpi eq, %arg1, %c0_i32 : i32
    %1 = arith.extui %0 : i1 to i32
    %c0_i32_0 = arith.constant 0 : i32
    %2 = arith.cmpi ne, %1, %c0_i32_0 : i32
    scf.if %2 {
      %c0_74 = arith.constant 0 : index
      %c0_75 = arith.constant 0 : index
      %c0_76 = arith.constant 0 : index
      %200 = vector.load %arg2[%c0_74, %c0_75, %c0_76] : memref<2x8x32xf32, #tpu.memory_space<vmem>>, vector<2x8x32xf32>
      %c0_77 = arith.constant 0 : index
      %c0_78 = arith.constant 0 : index
      %c0_79 = arith.constant 0 : index
      %201 = vector.load %arg14[%c0_77, %c0_78, %c0_79] : memref<2x8x32xf32, #tpu.memory_space<vmem>>, vector<2x8x32xf32>
      tpu.vector_store %arg14[%c0_77, %c0_78, %c0_79], %200 {strides = array<i32>} : memref<2x8x32xf32, #tpu.memory_space<vmem>>, vector<2x8x32xf32>,
    } else {
    }
    %c0 = arith.constant 0 : index
    %c0_1 = arith.constant 0 : index
    %c0_2 = arith.constant 0 : index
    %3 = vector.load %arg14[%c0, %c0_1, %c0_2] : memref<2x8x32xf32, #tpu.memory_space<vmem>>, vector<2x8x32xf32>
    %4 = vector.shape_cast %3 : vector<2x8x32xf32> to vector<16x32xf32>
    %5 = arith.truncf %4 : vector<16x32xf32> to vector<16x32xbf16>
    %c0_3 = arith.constant 0 : index
    %c0_4 = arith.constant 0 : index
    %c0_5 = arith.constant 0 : index
    %6 = vector.load %arg4[%c0_3, %c0_4, %c0_5] : memref<1x32x96xbf16, #tpu.memory_space<vmem>>, vector<1x32x96xbf16>
    %7 = vector.shape_cast %6 : vector<1x32x96xbf16> to vector<32x96xbf16>
    %cst = arith.constant dense<0.000000e+00> : vector<16x96xf32>
    %8 = tpu.matmul %5, %7, %cst {dimension_numbers = #tpu.dot_dimension_numbers<[1], [0], [0], [1], [0, 0, 1, 1], [], []>} : vector<16x32xbf16>, vector<32x96xbf16>, vector<16x96xf32> -> vector<16x96xf32>
    %c0_6 = arith.constant 0 : index
    %c0_7 = arith.constant 0 : index
    %c0_8 = arith.constant 0 : index
    %9 = vector.load %arg5[%c0_6, %c0_7, %c0_8] : memref<1x1x96xf32, #tpu.memory_space<vmem>>, vector<1x1x96xf32>
    %10 = vector.shape_cast %9 : vector<1x1x96xf32> to vector<1x96xf32>
    %11 = vector.broadcast %10 : vector<1x96xf32> to vector<16x96xf32>
    %12 = arith.addf %8, %11 : vector<16x96xf32>
    %c0_9 = arith.constant 0 : index
    %c0_10 = arith.constant 0 : index
    %c0_11 = arith.constant 0 : index
    %13 = vector.load %arg3[%c0_9, %c0_10, %c0_11] : memref<2x1x8xf32, #tpu.memory_space<vmem>>, vector<2x1x8xf32>
    %cst_12 = arith.constant 0.000000e+00 : f32
    %14 = vector.broadcast %cst_12 : f32 to vector<2x1x8xf32>
    %15 = arith.cmpf one, %13, %14 : vector<2x1x8xf32>
    %16 = vector.extract_strided_slice %12 {offsets = [0, 0], sizes = [16, 8], strides = [1, 1]} : vector<16x96xf32> to vector<16x8xf32>
    %17 = vector.shape_cast %16 : vector<16x8xf32> to vector<2x8x8xf32>
    %18 = arith.truncf %17 : vector<2x8x8xf32> to vector<2x8x8xbf16>
    %19 = vector.extract_strided_slice %12 {offsets = [0, 32], sizes = [16, 8], strides = [1, 1]} : vector<16x96xf32> to vector<16x8xf32>
    %20 = vector.shape_cast %19 : vector<16x8xf32> to vector<2x8x8xf32>
    %21 = arith.truncf %20 : vector<2x8x8xf32> to vector<2x8x8xbf16>
    %22 = vector.extract_strided_slice %12 {offsets = [0, 64], sizes = [16, 8], strides = [1, 1]} : vector<16x96xf32> to vector<16x8xf32>
    %23 = vector.shape_cast %22 : vector<16x8xf32> to vector<2x8x8xf32>
    %24 = arith.truncf %23 : vector<2x8x8xf32> to vector<2x8x8xbf16>
    "tpu.trace_start"() <{level = 10 : i32, message = "bqd,bkd->bqk"}> : () -> ()
    %cst_13 = arith.constant dense<0.000000e+00> : vector<2x8x8xf32>
    %25 = tpu.matmul %18, %21, %cst_13 {dimension_numbers = #tpu.dot_dimension_numbers<[2], [2], [1], [1], [0, 0, 0, 1, 1, 1], [0], [0]>} : vector<2x8x8xbf16>, vector<2x8x8xbf16>, vector<2x8x8xf32> -> vector<2x8x8xf32>
    %cst_14 = arith.constant -1.000000e+10 : f32
    "tpu.trace_stop"() : () -> ()
    %26 = vector.shape_cast %15 : vector<2x1x8xi1> to vector<2x1x8xi1>
    %27 = vector.broadcast %26 : vector<2x1x8xi1> to vector<2x8x8xi1>
    %28 = vector.broadcast %cst_14 : f32 to vector<2x8x8xf32>
    %29 = arith.select %27, %25, %28 : vector<2x8x8xi1>, vector<2x8x8xf32>
    %cst_15 = arith.constant dense<0xFF800000> : vector<2x8xf32>
    %30 = vector.multi_reduction <maximumf>, %29, %cst_15 [2] : vector<2x8x8xf32> to vector<2x8xf32>
    %31 = vector.shape_cast %30 : vector<2x8xf32> to vector<2x8x1xf32>
    %32 = vector.broadcast %31 : vector<2x8x1xf32> to vector<2x8x8xf32>
    %33 = arith.subf %29, %32 : vector<2x8x8xf32>
    %34 = math.exp %33 : vector<2x8x8xf32>
    %cst_16 = arith.constant dense<0.000000e+00> : vector<2x8xf32>
    %35 = vector.multi_reduction <add>, %34, %cst_16 [2] : vector<2x8x8xf32> to vector<2x8xf32>
    %36 = vector.shape_cast %35 : vector<2x8xf32> to vector<2x8x1xf32>
    %37 = tpu.reciprocal %36 {approx = true} : vector<2x8x1xf32> -> vector<2x8x1xf32>
    %38 = vector.broadcast %37 : vector<2x8x1xf32> to vector<2x8x8xf32>
    %39 = arith.mulf %34, %38 : vector<2x8x8xf32>
    %40 = arith.truncf %39 : vector<2x8x8xf32> to vector<2x8x8xbf16>
    "tpu.trace_start"() <{level = 10 : i32, message = "bqk,bkd->bqd"}> : () -> ()
    %cst_17 = arith.constant dense<0.000000e+00> : vector<2x8x8xf32>
    %41 = tpu.matmul %40, %24, %cst_17 {dimension_numbers = #tpu.dot_dimension_numbers<[2], [1], [1], [2], [0, 0, 0, 1, 1, 2], [0], [0]>} : vector<2x8x8xbf16>, vector<2x8x8xbf16>, vector<2x8x8xf32> -> vector<2x8x8xf32>
    "tpu.trace_stop"() : () -> ()
    %42 = vector.extract_strided_slice %12 {offsets = [0, 8], sizes = [16, 8], strides = [1, 1]} : vector<16x96xf32> to vector<16x8xf32>
    %43 = vector.shape_cast %42 : vector<16x8xf32> to vector<2x8x8xf32>
    %44 = arith.truncf %43 : vector<2x8x8xf32> to vector<2x8x8xbf16>
    %45 = vector.extract_strided_slice %12 {offsets = [0, 40], sizes = [16, 8], strides = [1, 1]} : vector<16x96xf32> to vector<16x8xf32>
    %46 = vector.shape_cast %45 : vector<16x8xf32> to vector<2x8x8xf32>
    %47 = arith.truncf %46 : vector<2x8x8xf32> to vector<2x8x8xbf16>
    %48 = vector.extract_strided_slice %12 {offsets = [0, 72], sizes = [16, 8], strides = [1, 1]} : vector<16x96xf32> to vector<16x8xf32>
    %49 = vector.shape_cast %48 : vector<16x8xf32> to vector<2x8x8xf32>
    %50 = arith.truncf %49 : vector<2x8x8xf32> to vector<2x8x8xbf16>
    "tpu.trace_start"() <{level = 10 : i32, message = "bqd,bkd->bqk"}> : () -> ()
    %cst_18 = arith.constant dense<0.000000e+00> : vector<2x8x8xf32>
    %51 = tpu.matmul %44, %47, %cst_18 {dimension_numbers = #tpu.dot_dimension_numbers<[2], [2], [1], [1], [0, 0, 0, 1, 1, 1], [0], [0]>} : vector<2x8x8xbf16>, vector<2x8x8xbf16>, vector<2x8x8xf32> -> vector<2x8x8xf32>
    %cst_19 = arith.constant -1.000000e+10 : f32
    "tpu.trace_stop"() : () -> ()
    %52 = vector.shape_cast %15 : vector<2x1x8xi1> to vector<2x1x8xi1>
    %53 = vector.broadcast %52 : vector<2x1x8xi1> to vector<2x8x8xi1>
    %54 = vector.broadcast %cst_19 : f32 to vector<2x8x8xf32>
    %55 = arith.select %53, %51, %54 : vector<2x8x8xi1>, vector<2x8x8xf32>
    %cst_20 = arith.constant dense<0xFF800000> : vector<2x8xf32>
    %56 = vector.multi_reduction <maximumf>, %55, %cst_20 [2] : vector<2x8x8xf32> to vector<2x8xf32>
    %57 = vector.shape_cast %56 : vector<2x8xf32> to vector<2x8x1xf32>
    %58 = vector.broadcast %57 : vector<2x8x1xf32> to vector<2x8x8xf32>
    %59 = arith.subf %55, %58 : vector<2x8x8xf32>
    %60 = math.exp %59 : vector<2x8x8xf32>
    %cst_21 = arith.constant dense<0.000000e+00> : vector<2x8xf32>
    %61 = vector.multi_reduction <add>, %60, %cst_21 [2] : vector<2x8x8xf32> to vector<2x8xf32>
    %62 = vector.shape_cast %61 : vector<2x8xf32> to vector<2x8x1xf32>
    %63 = tpu.reciprocal %62 {approx = true} : vector<2x8x1xf32> -> vector<2x8x1xf32>
    %64 = vector.broadcast %63 : vector<2x8x1xf32> to vector<2x8x8xf32>
    %65 = arith.mulf %60, %64 : vector<2x8x8xf32>
    %66 = arith.truncf %65 : vector<2x8x8xf32> to vector<2x8x8xbf16>
    "tpu.trace_start"() <{level = 10 : i32, message = "bqk,bkd->bqd"}> : () -> ()
    %cst_22 = arith.constant dense<0.000000e+00> : vector<2x8x8xf32>
    %67 = tpu.matmul %66, %50, %cst_22 {dimension_numbers = #tpu.dot_dimension_numbers<[2], [1], [1], [2], [0, 0, 0, 1, 1, 2], [0], [0]>} : vector<2x8x8xbf16>, vector<2x8x8xbf16>, vector<2x8x8xf32> -> vector<2x8x8xf32>
    "tpu.trace_stop"() : () -> ()
    %68 = vector.extract_strided_slice %12 {offsets = [0, 16], sizes = [16, 8], strides = [1, 1]} : vector<16x96xf32> to vector<16x8xf32>
    %69 = vector.shape_cast %68 : vector<16x8xf32> to vector<2x8x8xf32>
    %70 = arith.truncf %69 : vector<2x8x8xf32> to vector<2x8x8xbf16>
    %71 = vector.extract_strided_slice %12 {offsets = [0, 48], sizes = [16, 8], strides = [1, 1]} : vector<16x96xf32> to vector<16x8xf32>
    %72 = vector.shape_cast %71 : vector<16x8xf32> to vector<2x8x8xf32>
    %73 = arith.truncf %72 : vector<2x8x8xf32> to vector<2x8x8xbf16>
    %74 = vector.extract_strided_slice %12 {offsets = [0, 80], sizes = [16, 8], strides = [1, 1]} : vector<16x96xf32> to vector<16x8xf32>
    %75 = vector.shape_cast %74 : vector<16x8xf32> to vector<2x8x8xf32>
    %76 = arith.truncf %75 : vector<2x8x8xf32> to vector<2x8x8xbf16>
    "tpu.trace_start"() <{level = 10 : i32, message = "bqd,bkd->bqk"}> : () -> ()
    %cst_23 = arith.constant dense<0.000000e+00> : vector<2x8x8xf32>
    %77 = tpu.matmul %70, %73, %cst_23 {dimension_numbers = #tpu.dot_dimension_numbers<[2], [2], [1], [1], [0, 0, 0, 1, 1, 1], [0], [0]>} : vector<2x8x8xbf16>, vector<2x8x8xbf16>, vector<2x8x8xf32> -> vector<2x8x8xf32>
    %cst_24 = arith.constant -1.000000e+10 : f32
    "tpu.trace_stop"() : () -> ()
    %78 = vector.shape_cast %15 : vector<2x1x8xi1> to vector<2x1x8xi1>
    %79 = vector.broadcast %78 : vector<2x1x8xi1> to vector<2x8x8xi1>
    %80 = vector.broadcast %cst_24 : f32 to vector<2x8x8xf32>
    %81 = arith.select %79, %77, %80 : vector<2x8x8xi1>, vector<2x8x8xf32>
    %cst_25 = arith.constant dense<0xFF800000> : vector<2x8xf32>
    %82 = vector.multi_reduction <maximumf>, %81, %cst_25 [2] : vector<2x8x8xf32> to vector<2x8xf32>
    %83 = vector.shape_cast %82 : vector<2x8xf32> to vector<2x8x1xf32>
    %84 = vector.broadcast %83 : vector<2x8x1xf32> to vector<2x8x8xf32>
    %85 = arith.subf %81, %84 : vector<2x8x8xf32>
    %86 = math.exp %85 : vector<2x8x8xf32>
    %cst_26 = arith.constant dense<0.000000e+00> : vector<2x8xf32>
    %87 = vector.multi_reduction <add>, %86, %cst_26 [2] : vector<2x8x8xf32> to vector<2x8xf32>
    %88 = vector.shape_cast %87 : vector<2x8xf32> to vector<2x8x1xf32>
    %89 = tpu.reciprocal %88 {approx = true} : vector<2x8x1xf32> -> vector<2x8x1xf32>
    %90 = vector.broadcast %89 : vector<2x8x1xf32> to vector<2x8x8xf32>
    %91 = arith.mulf %86, %90 : vector<2x8x8xf32>
    %92 = arith.truncf %91 : vector<2x8x8xf32> to vector<2x8x8xbf16>
    "tpu.trace_start"() <{level = 10 : i32, message = "bqk,bkd->bqd"}> : () -> ()
    %cst_27 = arith.constant dense<0.000000e+00> : vector<2x8x8xf32>
    %93 = tpu.matmul %92, %76, %cst_27 {dimension_numbers = #tpu.dot_dimension_numbers<[2], [1], [1], [2], [0, 0, 0, 1, 1, 2], [0], [0]>} : vector<2x8x8xbf16>, vector<2x8x8xbf16>, vector<2x8x8xf32> -> vector<2x8x8xf32>
    "tpu.trace_stop"() : () -> ()
    %94 = vector.extract_strided_slice %12 {offsets = [0, 24], sizes = [16, 8], strides = [1, 1]} : vector<16x96xf32> to vector<16x8xf32>
    %95 = vector.shape_cast %94 : vector<16x8xf32> to vector<2x8x8xf32>
    %96 = arith.truncf %95 : vector<2x8x8xf32> to vector<2x8x8xbf16>
    %97 = vector.extract_strided_slice %12 {offsets = [0, 56], sizes = [16, 8], strides = [1, 1]} : vector<16x96xf32> to vector<16x8xf32>
    %98 = vector.shape_cast %97 : vector<16x8xf32> to vector<2x8x8xf32>
    %99 = arith.truncf %98 : vector<2x8x8xf32> to vector<2x8x8xbf16>
    %100 = vector.extract_strided_slice %12 {offsets = [0, 88], sizes = [16, 8], strides = [1, 1]} : vector<16x96xf32> to vector<16x8xf32>
    %101 = vector.shape_cast %100 : vector<16x8xf32> to vector<2x8x8xf32>
    %102 = arith.truncf %101 : vector<2x8x8xf32> to vector<2x8x8xbf16>
    "tpu.trace_start"() <{level = 10 : i32, message = "bqd,bkd->bqk"}> : () -> ()
    %cst_28 = arith.constant dense<0.000000e+00> : vector<2x8x8xf32>
    %103 = tpu.matmul %96, %99, %cst_28 {dimension_numbers = #tpu.dot_dimension_numbers<[2], [2], [1], [1], [0, 0, 0, 1, 1, 1], [0], [0]>} : vector<2x8x8xbf16>, vector<2x8x8xbf16>, vector<2x8x8xf32> -> vector<2x8x8xf32>
    %cst_29 = arith.constant -1.000000e+10 : f32
    "tpu.trace_stop"() : () -> ()
    %104 = vector.shape_cast %15 : vector<2x1x8xi1> to vector<2x1x8xi1>
    %105 = vector.broadcast %104 : vector<2x1x8xi1> to vector<2x8x8xi1>
    %106 = vector.broadcast %cst_29 : f32 to vector<2x8x8xf32>
    %107 = arith.select %105, %103, %106 : vector<2x8x8xi1>, vector<2x8x8xf32>
    %cst_30 = arith.constant dense<0xFF800000> : vector<2x8xf32>
    %108 = vector.multi_reduction <maximumf>, %107, %cst_30 [2] : vector<2x8x8xf32> to vector<2x8xf32>
    %109 = vector.shape_cast %108 : vector<2x8xf32> to vector<2x8x1xf32>
    %110 = vector.broadcast %109 : vector<2x8x1xf32> to vector<2x8x8xf32>
    %111 = arith.subf %107, %110 : vector<2x8x8xf32>
    %112 = math.exp %111 : vector<2x8x8xf32>
    %cst_31 = arith.constant dense<0.000000e+00> : vector<2x8xf32>
    %113 = vector.multi_reduction <add>, %112, %cst_31 [2] : vector<2x8x8xf32> to vector<2x8xf32>
    %114 = vector.shape_cast %113 : vector<2x8xf32> to vector<2x8x1xf32>
    %115 = tpu.reciprocal %114 {approx = true} : vector<2x8x1xf32> -> vector<2x8x1xf32>
    %116 = vector.broadcast %115 : vector<2x8x1xf32> to vector<2x8x8xf32>
    %117 = arith.mulf %112, %116 : vector<2x8x8xf32>
    %118 = arith.truncf %117 : vector<2x8x8xf32> to vector<2x8x8xbf16>
    "tpu.trace_start"() <{level = 10 : i32, message = "bqk,bkd->bqd"}> : () -> ()
    %cst_32 = arith.constant dense<0.000000e+00> : vector<2x8x8xf32>
    %119 = tpu.matmul %118, %102, %cst_32 {dimension_numbers = #tpu.dot_dimension_numbers<[2], [1], [1], [2], [0, 0, 0, 1, 1, 2], [0], [0]>} : vector<2x8x8xbf16>, vector<2x8x8xbf16>, vector<2x8x8xf32> -> vector<2x8x8xf32>
    "tpu.trace_stop"() : () -> ()
    %120 = tpu.concatenate %41, %67, %93, %119 in 2 : vector<2x8x8xf32>, vector<2x8x8xf32>, vector<2x8x8xf32>, vector<2x8x8xf32> -> vector<2x8x32xf32>
    %121 = vector.shape_cast %120 : vector<2x8x32xf32> to vector<16x32xf32>
    %122 = arith.truncf %121 : vector<16x32xf32> to vector<16x32xbf16>
    %c0_33 = arith.constant 0 : index
    %c0_34 = arith.constant 0 : index
    %c0_35 = arith.constant 0 : index
    %123 = vector.load %arg6[%c0_33, %c0_34, %c0_35] : memref<1x32x32xbf16, #tpu.memory_space<vmem>>, vector<1x32x32xbf16>
    %124 = vector.shape_cast %123 : vector<1x32x32xbf16> to vector<32x32xbf16>
    %cst_36 = arith.constant dense<0.000000e+00> : vector<16x32xf32>
    %125 = tpu.matmul %122, %124, %cst_36 {dimension_numbers = #tpu.dot_dimension_numbers<[1], [0], [0], [1], [0, 0, 1, 1], [], []>} : vector<16x32xbf16>, vector<32x32xbf16>, vector<16x32xf32> -> vector<16x32xf32>
    %c0_37 = arith.constant 0 : index
    %c0_38 = arith.constant 0 : index
    %c0_39 = arith.constant 0 : index
    %126 = vector.load %arg7[%c0_37, %c0_38, %c0_39] : memref<1x1x32xf32, #tpu.memory_space<vmem>>, vector<1x1x32xf32>
    %127 = vector.shape_cast %126 : vector<1x1x32xf32> to vector<1x32xf32>
    %128 = vector.broadcast %127 : vector<1x32xf32> to vector<16x32xf32>
    %129 = arith.addf %125, %128 : vector<16x32xf32>
    %c0_40 = arith.constant 0 : index
    %c0_41 = arith.constant 0 : index
    %c0_42 = arith.constant 0 : index
    %130 = vector.load %arg12[%c0_40, %c0_41, %c0_42] : memref<1x1x32xf32, #tpu.memory_space<vmem>>, vector<1x1x32xf32>
    %131 = vector.shape_cast %130 : vector<1x1x32xf32> to vector<1x32xf32>
    %c0_43 = arith.constant 0 : index
    %c0_44 = arith.constant 0 : index
    %c0_45 = arith.constant 0 : index
    %132 = vector.load %arg13[%c0_43, %c0_44, %c0_45] : memref<1x1x32xf32, #tpu.memory_space<vmem>>, vector<1x1x32xf32>
    %133 = vector.shape_cast %132 : vector<1x1x32xf32> to vector<1x32xf32>
    %134 = arith.addf %4, %129 : vector<16x32xf32>
    %cst_46 = arith.constant dense<0.000000e+00> : vector<16xf32>
    %135 = vector.multi_reduction <add>, %134, %cst_46 [1] : vector<16x32xf32> to vector<16xf32>
    %136 = vector.shape_cast %135 : vector<16xf32> to vector<16x1xf32>
    %cst_47 = arith.constant 3.200000e+01 : f32
    %137 = vector.broadcast %cst_47 : f32 to vector<16x1xf32>
    %138 = arith.divf %136, %137 : vector<16x1xf32>
    %139 = vector.broadcast %138 : vector<16x1xf32> to vector<16x32xf32>
    %140 = arith.subf %134, %139 : vector<16x32xf32>
    %141 = arith.mulf %140, %140 : vector<16x32xf32>
    %cst_48 = arith.constant dense<0.000000e+00> : vector<16xf32>
    %142 = vector.multi_reduction <add>, %141, %cst_48 [1] : vector<16x32xf32> to vector<16xf32>
    %143 = vector.shape_cast %142 : vector<16xf32> to vector<16x1xf32>
    %cst_49 = arith.constant 3.200000e+01 : f32
    %144 = vector.broadcast %cst_49 : f32 to vector<16x1xf32>
    %145 = arith.divf %143, %144 : vector<16x1xf32>
    %146 = vector.broadcast %138 : vector<16x1xf32> to vector<16x32xf32>
    %147 = arith.subf %134, %146 : vector<16x32xf32>
    %cst_50 = arith.constant 9.99999974E-6 : f32
    %148 = vector.broadcast %cst_50 : f32 to vector<16x1xf32>
    %149 = arith.addf %145, %148 : vector<16x1xf32>
    %150 = math.rsqrt %149 : vector<16x1xf32>
    %151 = vector.broadcast %150 : vector<16x1xf32> to vector<16x32xf32>
    %152 = arith.mulf %147, %151 : vector<16x32xf32>
    %153 = vector.broadcast %131 : vector<1x32xf32> to vector<16x32xf32>
    %154 = arith.mulf %152, %153 : vector<16x32xf32>
    %155 = vector.broadcast %133 : vector<1x32xf32> to vector<16x32xf32>
    %156 = arith.addf %154, %155 : vector<16x32xf32>
    %157 = arith.truncf %156 : vector<16x32xf32> to vector<16x32xbf16>
    %c0_51 = arith.constant 0 : index
    %c0_52 = arith.constant 0 : index
    %c0_53 = arith.constant 0 : index
    %158 = vector.load %arg8[%c0_51, %c0_52, %c0_53] : memref<1x32x64xbf16, #tpu.memory_space<vmem>>, vector<1x32x64xbf16>
    %159 = vector.shape_cast %158 : vector<1x32x64xbf16> to vector<32x64xbf16>
    %cst_54 = arith.constant dense<0.000000e+00> : vector<16x64xf32>
    %160 = tpu.matmul %157, %159, %cst_54 {dimension_numbers = #tpu.dot_dimension_numbers<[1], [0], [0], [1], [0, 0, 1, 1], [], []>} : vector<16x32xbf16>, vector<32x64xbf16>, vector<16x64xf32> -> vector<16x64xf32>
    %c0_55 = arith.constant 0 : index
    %c0_56 = arith.constant 0 : index
    %c0_57 = arith.constant 0 : index
    %161 = vector.load %arg9[%c0_55, %c0_56, %c0_57] : memref<1x1x64xf32, #tpu.memory_space<vmem>>, vector<1x1x64xf32>
    %162 = vector.shape_cast %161 : vector<1x1x64xf32> to vector<1x64xf32>
    %163 = vector.broadcast %162 : vector<1x64xf32> to vector<16x64xf32>
    %164 = arith.addf %160, %163 : vector<16x64xf32>
    %cst_58 = arith.constant 0.000000e+00 : f32
    %165 = vector.broadcast %cst_58 : f32 to vector<16x64xf32>
    %166 = arith.maximumf %164, %165 : vector<16x64xf32>
    %167 = arith.truncf %166 : vector<16x64xf32> to vector<16x64xbf16>
    %c0_59 = arith.constant 0 : index
    %c0_60 = arith.constant 0 : index
    %c0_61 = arith.constant 0 : index
    %168 = vector.load %arg10[%c0_59, %c0_60, %c0_61] : memref<1x64x32xbf16, #tpu.memory_space<vmem>>, vector<1x64x32xbf16>
    %169 = vector.shape_cast %168 : vector<1x64x32xbf16> to vector<64x32xbf16>
    %cst_62 = arith.constant dense<0.000000e+00> : vector<16x32xf32>
    %170 = tpu.matmul %167, %169, %cst_62 {dimension_numbers = #tpu.dot_dimension_numbers<[1], [0], [0], [1], [0, 0, 1, 1], [], []>} : vector<16x64xbf16>, vector<64x32xbf16>, vector<16x32xf32> -> vector<16x32xf32>
    %c0_63 = arith.constant 0 : index
    %c0_64 = arith.constant 0 : index
    %c0_65 = arith.constant 0 : index
    %171 = vector.load %arg11[%c0_63, %c0_64, %c0_65] : memref<1x1x32xf32, #tpu.memory_space<vmem>>, vector<1x1x32xf32>
    %172 = vector.shape_cast %171 : vector<1x1x32xf32> to vector<1x32xf32>
    %173 = vector.broadcast %172 : vector<1x32xf32> to vector<16x32xf32>
    %174 = arith.addf %170, %173 : vector<16x32xf32>
    %175 = arith.addf %156, %174 : vector<16x32xf32>
    %cst_66 = arith.constant dense<0.000000e+00> : vector<16xf32>
    %176 = vector.multi_reduction <add>, %175, %cst_66 [1] : vector<16x32xf32> to vector<16xf32>
    %177 = vector.shape_cast %176 : vector<16xf32> to vector<16x1xf32>
    %cst_67 = arith.constant 3.200000e+01 : f32
    %178 = vector.broadcast %cst_67 : f32 to vector<16x1xf32>
    %179 = arith.divf %177, %178 : vector<16x1xf32>
    %180 = vector.broadcast %179 : vector<16x1xf32> to vector<16x32xf32>
    %181 = arith.subf %175, %180 : vector<16x32xf32>
    %182 = arith.mulf %181, %181 : vector<16x32xf32>
    %cst_68 = arith.constant dense<0.000000e+00> : vector<16xf32>
    %183 = vector.multi_reduction <add>, %182, %cst_68 [1] : vector<16x32xf32> to vector<16xf32>
    %184 = vector.shape_cast %183 : vector<16xf32> to vector<16x1xf32>
    %cst_69 = arith.constant 3.200000e+01 : f32
    %185 = vector.broadcast %cst_69 : f32 to vector<16x1xf32>
    %186 = arith.divf %184, %185 : vector<16x1xf32>
    %187 = vector.broadcast %179 : vector<16x1xf32> to vector<16x32xf32>
    %188 = arith.subf %175, %187 : vector<16x32xf32>
    %cst_70 = arith.constant 9.99999974E-6 : f32
    %189 = vector.broadcast %cst_70 : f32 to vector<16x1xf32>
    %190 = arith.addf %186, %189 : vector<16x1xf32>
    %191 = math.rsqrt %190 : vector<16x1xf32>
    %192 = vector.broadcast %191 : vector<16x1xf32> to vector<16x32xf32>
    %193 = arith.mulf %188, %192 : vector<16x32xf32>
    %194 = vector.broadcast %131 : vector<1x32xf32> to vector<16x32xf32>
    %195 = arith.mulf %193, %194 : vector<16x32xf32>
    %196 = vector.broadcast %133 : vector<1x32xf32> to vector<16x32xf32>
    %197 = arith.addf %195, %196 : vector<16x32xf32>
    %198 = vector.shape_cast %197 : vector<16x32xf32> to vector<2x8x32xf32>
    %c0_71 = arith.constant 0 : index
    %c0_72 = arith.constant 0 : index
    %c0_73 = arith.constant 0 : index
    %199 = vector.load %arg14[%c0_71, %c0_72, %c0_73] : memref<2x8x32xf32, #tpu.memory_space<vmem>>, vector<2x8x32xf32>
    tpu.vector_store %arg14[%c0_71, %c0_72, %c0_73], %198 {strides = array<i32>} : memref<2x8x32xf32, #tpu.memory_space<vmem>>, vector<2x8x32xf32>,
    return
  }
  func.func @transform_0(%arg0: i32, %arg1: i32) -> (i32, i32, i32) {
    %c0_i32 = arith.constant 0 : i32
    %c0_i32_0 = arith.constant 0 : i32
    %c0_i32_1 = arith.constant 0 : i32
    return %arg0, %c0_i32, %c0_i32_0 : i32, i32, i32
  }
  func.func @transform_1(%arg0: i32, %arg1: i32) -> (i32, i32, i32) {
    %c0_i32 = arith.constant 0 : i32
    %c0_i32_0 = arith.constant 0 : i32
    %c0_i32_1 = arith.constant 0 : i32
    return %arg0, %c0_i32, %c0_i32_0 : i32, i32, i32
  }
  func.func @transform_2(%arg0: i32, %arg1: i32) -> (i32, i32, i32) {
    %c0_i32 = arith.constant 0 : i32
    %c0_i32_0 = arith.constant 0 : i32
    %c0_i32_1 = arith.constant 0 : i32
    return %arg1, %c0_i32, %c0_i32_0 : i32, i32, i32
  }
  func.func @transform_3(%arg0: i32, %arg1: i32) -> (i32, i32, i32) {
    %c0_i32 = arith.constant 0 : i32
    %c0_i32_0 = arith.constant 0 : i32
    %c0_i32_1 = arith.constant 0 : i32
    return %arg1, %c0_i32, %c0_i32_0 : i32, i32, i32
  }
  func.func @transform_4(%arg0: i32, %arg1: i32) -> (i32, i32, i32) {
    %c0_i32 = arith.constant 0 : i32
    %c0_i32_0 = arith.constant 0 : i32
    %c0_i32_1 = arith.constant 0 : i32
    return %arg1, %c0_i32, %c0_i32_0 : i32, i32, i32
  }
  func.func @transform_5(%arg0: i32, %arg1: i32) -> (i32, i32, i32) {
    %c0_i32 = arith.constant 0 : i32
    %c0_i32_0 = arith.constant 0 : i32
    %c0_i32_1 = arith.constant 0 : i32
    return %arg1, %c0_i32, %c0_i32_0 : i32, i32, i32
  }
  func.func @transform_6(%arg0: i32, %arg1: i32) -> (i32, i32, i32) {
    %c0_i32 = arith.constant 0 : i32
    %c0_i32_0 = arith.constant 0 : i32
    %c0_i32_1 = arith.constant 0 : i32
    return %arg1, %c0_i32, %c0_i32_0 : i32, i32, i32
  }
  func.func @transform_7(%arg0: i32, %arg1: i32) -> (i32, i32, i32) {
    %c0_i32 = arith.constant 0 : i32
    %c0_i32_0 = arith.constant 0 : i32
    %c0_i32_1 = arith.constant 0 : i32
    return %arg1, %c0_i32, %c0_i32_0 : i32, i32, i32
  }
  func.func @transform_8(%arg0: i32, %arg1: i32) -> (i32, i32, i32) {
    %c0_i32 = arith.constant 0 : i32
    %c0_i32_0 = arith.constant 0 : i32
    %c0_i32_1 = arith.constant 0 : i32
    return %arg1, %c0_i32, %c0_i32_0 : i32, i32, i32
  }
  func.func @transform_9(%arg0: i32, %arg1: i32) -> (i32, i32, i32) {
    %c0_i32 = arith.constant 0 : i32
    %c0_i32_0 = arith.constant 0 : i32
    %c0_i32_1 = arith.constant 0 : i32
    return %arg1, %c0_i32, %c0_i32_0 : i32, i32, i32
  }
  func.func @transform_10(%arg0: i32, %arg1: i32) -> (i32, i32, i32) {
    %c0_i32 = arith.constant 0 : i32
    %c0_i32_0 = arith.constant 0 : i32
    %c0_i32_1 = arith.constant 0 : i32
    return %arg1, %c0_i32, %c0_i32_0 : i32, i32, i32
  }
  func.func @transform_11(%arg0: i32, %arg1: i32) -> (i32, i32, i32) {
    %c0_i32 = arith.constant 0 : i32
    %c0_i32_0 = arith.constant 0 : i32
    %c0_i32_1 = arith.constant 0 : i32
    return %arg1, %c0_i32, %c0_i32_0 : i32, i32, i32
  }
  func.func @transform_12(%arg0: i32, %arg1: i32) -> (i32, i32, i32) {
    %c0_i32 = arith.constant 0 : i32
    %c0_i32_0 = arith.constant 0 : i32
    %c0_i32_1 = arith.constant 0 : i32
    return %arg0, %c0_i32, %c0_i32_0 : i32, i32, i32
  }
}

</mosaic_0001>

<llo_original>
// kernel: tpu_custom_call.1
$region0: #{tpu_custom_call.1}
  #allocation0 [shape = 'u32[]', space=smem, size = 0x4, offset = 0x4, fixed_abs, tag = 'smem constant byte address 0x4 - core index']
  #allocation1 [shape = 'u32[144,128]{1,0:T(1,128)}', space=vmem, size = 0x12000, scoped, tag = 'internal scratch']
  %s0 = inlined_call_operand.hbm [shape: f32[2,8,32], index: 0, kind: input, shape index: {}]
  %s1 = inlined_call_operand.vmem [shape: f32[2,1,8], index: 1, kind: input, shape index: {}]
  %s2 = inlined_call_operand.vmem [shape: bf16[2,32,96], index: 2, kind: input, shape index: {}]
  %s3 = inlined_call_operand.vmem [shape: f32[2,1,96], index: 3, kind: input, shape index: {}]
  %s4 = inlined_call_operand.vmem [shape: bf16[2,32,32], index: 4, kind: input, shape index: {}]
  %s5 = inlined_call_operand.vmem [shape: f32[2,1,32], index: 5, kind: input, shape index: {}]
  %s6 = inlined_call_operand.vmem [shape: bf16[2,32,64], index: 6, kind: input, shape index: {}]
  %s7 = inlined_call_operand.vmem [shape: f32[2,1,64], index: 7, kind: input, shape index: {}]
  %s8 = inlined_call_operand.vmem [shape: bf16[2,64,32], index: 8, kind: input, shape index: {}]
  %s9 = inlined_call_operand.vmem [shape: f32[2,1,32], index: 9, kind: input, shape index: {}]
  %s10 = inlined_call_operand.vmem [shape: f32[2,1,32], index: 10, kind: input, shape index: {}]
  %s11 = inlined_call_operand.vmem [shape: f32[2,1,32], index: 11, kind: input, shape index: {}]
  %s12 = inlined_call_operand.hbm [shape: f32[2,8,32], index: 12, kind: output, shape index: {}]
  %s13 = sld [smem:[#allocation0]]
  $region89: #{tpu_custom_call.1} parent=0
    _
  %s15 = ssub.s32 1, %s13
  %s16 = scalar_select 0, %s15, %s13
  $region1: #{tpu_custom_call.1} parent=0
    #allocation2 [shape = 'u8[8192]{0}', space=vmem, size = 0x2000, scoped, tag = 'input window, operand 0, single buffered']
    #allocation3 [shape = 's32[2]{0}', space=sflag, size = 0x8, scoped, tag = 'scoped memory for tpu_custom_call.1']
    #allocation4 [shape = 's32[2]{0}', space=sflag, size = 0x8, scoped, tag = 'scoped memory for tpu_custom_call.1']
    #allocation5 [shape = 'u8[8192]{0}', space=vmem, size = 0x2000, scoped, tag = 'output window, operand 0, single buffered']
    %17 = vsyncpa [#allocation3], 0
    %18 = vsyncpa [#allocation4], 0
    loop: start=0, step=1, limit=4
    $region2: #{tpu_custom_call.1} parent=1 // loop_pre_header
      _
    $region3: #{tpu_custom_call.1} parent=1 // loop_header
      %s20 = sphi 0, %s24
      %p21 = scmp.ge.s32.totalorder %s20, 4
      %s27 = sphi 0, %s39
      %s28 = sphi 0, %s35
      %s29 = sphi 0, %s27
      %s30 = sphi 0, %s28
      %s31 = sphi 0, %s29
      %s32 = sphi 0, %s30
      %s42 = sphi 0, %s44
      %s45 = sphi 0, %s42
      %s46 = sphi 0, %s45
      %s62 = sphi 0, %s46
      %s68 = sphi 0, %s70
      %s71 = sphi 0, %s68
      %s72 = sphi 0, %s71
      %s88 = sphi 0, %s72
      %s94 = sphi 0, %s96
      %s97 = sphi 0, %s94
      %s98 = sphi 0, %s97
      %s114 = sphi 0, %s98
      %s120 = sphi 0, %s122
      %s123 = sphi 0, %s120
      %s124 = sphi 0, %s123
      %s140 = sphi 0, %s124
      %s146 = sphi 0, %s148
      %s149 = sphi 0, %s146
      %s150 = sphi 0, %s149
      %s166 = sphi 0, %s150
      %s172 = sphi 0, %s174
      %s175 = sphi 0, %s172
      %s176 = sphi 0, %s175
      %s192 = sphi 0, %s176
      %s198 = sphi 0, %s200
      %s201 = sphi 0, %s198
      %s202 = sphi 0, %s201
      %s218 = sphi 0, %s202
      %s224 = sphi 0, %s226
      %s227 = sphi 0, %s224
      %s228 = sphi 0, %s227
      %s244 = sphi 0, %s228
      %s250 = sphi 0, %s252
      %s253 = sphi 0, %s250
      %s254 = sphi 0, %s253
      %s270 = sphi 0, %s254
      %s276 = sphi 0, %s278
      %s279 = sphi 0, %s276
      %s280 = sphi 0, %s279
      %s296 = sphi 0, %s280
      %s302 = sphi 0, %s304
      %s305 = sphi 0, %s302
      %s306 = sphi 0, %s305
      %s322 = sphi 0, %s306
      %s328 = sphi 0, %s330
      %s331 = sphi 0, %s328
      %s332 = sphi 0, %s331
      %s348 = sphi 0, %s332
      %s354 = sphi 0, %s356
      %s357 = sphi 0, %s354
      %s358 = sphi 0, %s357
      %s374 = sphi 0, %s358
    $region4: #{tpu_custom_call.1} parent=1 // loop_header_branch
      %23 = sbr.rel (%p21) target = $region8
    $region5: #{tpu_custom_call.1} parent=1 // loop_body
      %s25 = ssub.s32 %s20, 1
      %s26 = ssub.s32 %s20, 2
      %s33 = sadd.s32 1, %s28
      %p34 = scmp.ge.s32.totalorder %s33, 2
      %s35 = scalar_select %p34, 0, %s33
      %s36 = sadd.s32 1, %s27
      %s37 = scalar_select %p34, %s36, %s27
      %p38 = scmp.ge.s32.totalorder %s37, 1
      %s39 = scalar_select %p38, 0, %s37
      %s40 = ssub.s32 %s27, %s39
      %p41 = scmp.eq.s32.totalorder %s40, 0
      %s43 = sadd.s32 %s42, 1
      %s44 = scalar_select %p41, %s42, %s43
      %p47 = pneg %p41
      %p48 = scmp.eq.s32.totalorder %s20, 1
      %p49 = por %p47, %p48
      %p50 = scmp.ne.s32.totalorder %s42, %s45
      %p51 = scmp.eq.s32.totalorder %s20, 0
      %p52 = por %p50, %p51
      %p53 = scmp.ne.s32.totalorder %s42, %s45
      %p54 = scmp.eq.s32.totalorder %s25, 1
      %p55 = por %p53, %p54
      %p56 = scmp.ne.s32.totalorder %s45, %s46
      %p57 = scmp.eq.s32.totalorder %s25, 0
      %p58 = por %p56, %p57
      %p59 = scmp.ne.s32.totalorder %s45, %s46
      %p60 = scmp.eq.s32.totalorder %s26, 1
      %p61 = por %p59, %p60
      %p63 = scmp.ne.s32.totalorder %s46, %s62
      %p64 = scmp.eq.s32.totalorder %s26, 0
      %p65 = por %p63, %p64
      %s66 = ssub.s32 %s27, %s39
      %p67 = scmp.eq.s32.totalorder %s66, 0
      %s69 = sadd.s32 %s68, 1
      %s70 = scalar_select %p67, %s68, %s69
      %p73 = pneg %p67
      %p74 = scmp.eq.s32.totalorder %s20, 1
      %p75 = por %p73, %p74
      %p76 = scmp.ne.s32.totalorder %s68, %s71
      %p77 = scmp.eq.s32.totalorder %s20, 0
      %p78 = por %p76, %p77
      %p79 = scmp.ne.s32.totalorder %s68, %s71
      %p80 = scmp.eq.s32.totalorder %s25, 1
      %p81 = por %p79, %p80
      %p82 = scmp.ne.s32.totalorder %s71, %s72
      %p83 = scmp.eq.s32.totalorder %s25, 0
      %p84 = por %p82, %p83
      %p85 = scmp.ne.s32.totalorder %s71, %s72
      %p86 = scmp.eq.s32.totalorder %s26, 1
      %p87 = por %p85, %p86
      %p89 = scmp.ne.s32.totalorder %s72, %s88
      %p90 = scmp.eq.s32.totalorder %s26, 0
      %p91 = por %p89, %p90
      %s92 = ssub.s32 %s28, %s35
      %p93 = scmp.eq.s32.totalorder %s92, 0
      %s95 = sadd.s32 %s94, 1
      %s96 = scalar_select %p93, %s94, %s95
      %p99 = pneg %p93
      %p100 = scmp.eq.s32.totalorder %s20, 1
      %p101 = por %p99, %p100
      %p102 = scmp.ne.s32.totalorder %s94, %s97
      %p103 = scmp.eq.s32.totalorder %s20, 0
      %p104 = por %p102, %p103
      %p105 = scmp.ne.s32.totalorder %s94, %s97
      %p106 = scmp.eq.s32.totalorder %s25, 1
      %p107 = por %p105, %p106
      %p108 = scmp.ne.s32.totalorder %s97, %s98
      %p109 = scmp.eq.s32.totalorder %s25, 0
      %p110 = por %p108, %p109
      %p111 = scmp.ne.s32.totalorder %s97, %s98
      %p112 = scmp.eq.s32.totalorder %s26, 1
      %p113 = por %p111, %p112
      %p115 = scmp.ne.s32.totalorder %s98, %s114
      %p116 = scmp.eq.s32.totalorder %s26, 0
      %p117 = por %p115, %p116
      %s118 = ssub.s32 %s28, %s35
      %p119 = scmp.eq.s32.totalorder %s118, 0
      %s121 = sadd.s32 %s120, 1
      %s122 = scalar_select %p119, %s120, %s121
      %p125 = pneg %p119
      %p126 = scmp.eq.s32.totalorder %s20, 1
      %p127 = por %p125, %p126
      %p128 = scmp.ne.s32.totalorder %s120, %s123
      %p129 = scmp.eq.s32.totalorder %s20, 0
      %p130 = por %p128, %p129
      %p131 = scmp.ne.s32.totalorder %s120, %s123
      %p132 = scmp.eq.s32.totalorder %s25, 1
      %p133 = por %p131, %p132
      %p134 = scmp.ne.s32.totalorder %s123, %s124
      %p135 = scmp.eq.s32.totalorder %s25, 0
      %p136 = por %p134, %p135
      %p137 = scmp.ne.s32.totalorder %s123, %s124
      %p138 = scmp.eq.s32.totalorder %s26, 1
      %p139 = por %p137, %p138
      %p141 = scmp.ne.s32.totalorder %s124, %s140
      %p142 = scmp.eq.s32.totalorder %s26, 0
      %p143 = por %p141, %p142
      %s144 = ssub.s32 %s28, %s35
      %p145 = scmp.eq.s32.totalorder %s144, 0
      %s147 = sadd.s32 %s146, 1
      %s148 = scalar_select %p145, %s146, %s147
      %p151 = pneg %p145
      %p152 = scmp.eq.s32.totalorder %s20, 1
      %p153 = por %p151, %p152
      %p154 = scmp.ne.s32.totalorder %s146, %s149
      %p155 = scmp.eq.s32.totalorder %s20, 0
      %p156 = por %p154, %p155
      %p157 = scmp.ne.s32.totalorder %s146, %s149
      %p158 = scmp.eq.s32.totalorder %s25, 1
      %p159 = por %p157, %p158
      %p160 = scmp.ne.s32.totalorder %s149, %s150
      %p161 = scmp.eq.s32.totalorder %s25, 0
      %p162 = por %p160, %p161
      %p163 = scmp.ne.s32.totalorder %s149, %s150
      %p164 = scmp.eq.s32.totalorder %s26, 1
      %p165 = por %p163, %p164
      %p167 = scmp.ne.s32.totalorder %s150, %s166
      %p168 = scmp.eq.s32.totalorder %s26, 0
      %p169 = por %p167, %p168
      %s170 = ssub.s32 %s28, %s35
      %p171 = scmp.eq.s32.totalorder %s170, 0
      %s173 = sadd.s32 %s172, 1
      %s174 = scalar_select %p171, %s172, %s173
      %p177 = pneg %p171
      %p178 = scmp.eq.s32.totalorder %s20, 1
      %p179 = por %p177, %p178
      %p180 = scmp.ne.s32.totalorder %s172, %s175
      %p181 = scmp.eq.s32.totalorder %s20, 0
      %p182 = por %p180, %p181
      %p183 = scmp.ne.s32.totalorder %s172, %s175
      %p184 = scmp.eq.s32.totalorder %s25, 1
      %p185 = por %p183, %p184
      %p186 = scmp.ne.s32.totalorder %s175, %s176
      %p187 = scmp.eq.s32.totalorder %s25, 0
      %p188 = por %p186, %p187
      %p189 = scmp.ne.s32.totalorder %s175, %s176
      %p190 = scmp.eq.s32.totalorder %s26, 1
      %p191 = por %p189, %p190
      %p193 = scmp.ne.s32.totalorder %s176, %s192
      %p194 = scmp.eq.s32.totalorder %s26, 0
      %p195 = por %p193, %p194
      %s196 = ssub.s32 %s28, %s35
      %p197 = scmp.eq.s32.totalorder %s196, 0
      %s199 = sadd.s32 %s198, 1
      %s200 = scalar_select %p197, %s198, %s199
      %p203 = pneg %p197
      %p204 = scmp.eq.s32.totalorder %s20, 1
      %p205 = por %p203, %p204
      %p206 = scmp.ne.s32.totalorder %s198, %s201
      %p207 = scmp.eq.s32.totalorder %s20, 0
      %p208 = por %p206, %p207
      %p209 = scmp.ne.s32.totalorder %s198, %s201
      %p210 = scmp.eq.s32.totalorder %s25, 1
      %p211 = por %p209, %p210
      %p212 = scmp.ne.s32.totalorder %s201, %s202
      %p213 = scmp.eq.s32.totalorder %s25, 0
      %p214 = por %p212, %p213
      %p215 = scmp.ne.s32.totalorder %s201, %s202
      %p216 = scmp.eq.s32.totalorder %s26, 1
      %p217 = por %p215, %p216
      %p219 = scmp.ne.s32.totalorder %s202, %s218
      %p220 = scmp.eq.s32.totalorder %s26, 0
      %p221 = por %p219, %p220
      %s222 = ssub.s32 %s28, %s35
      %p223 = scmp.eq.s32.totalorder %s222, 0
      %s225 = sadd.s32 %s224, 1
      %s226 = scalar_select %p223, %s224, %s225
      %p229 = pneg %p223
      %p230 = scmp.eq.s32.totalorder %s20, 1
      %p231 = por %p229, %p230
      %p232 = scmp.ne.s32.totalorder %s224, %s227
      %p233 = scmp.eq.s32.totalorder %s20, 0
      %p234 = por %p232, %p233
      %p235 = scmp.ne.s32.totalorder %s224, %s227
      %p236 = scmp.eq.s32.totalorder %s25, 1
      %p237 = por %p235, %p236
      %p238 = scmp.ne.s32.totalorder %s227, %s228
      %p239 = scmp.eq.s32.totalorder %s25, 0
      %p240 = por %p238, %p239
      %p241 = scmp.ne.s32.totalorder %s227, %s228
      %p242 = scmp.eq.s32.totalorder %s26, 1
      %p243 = por %p241, %p242
      %p245 = scmp.ne.s32.totalorder %s228, %s244
      %p246 = scmp.eq.s32.totalorder %s26, 0
      %p247 = por %p245, %p246
      %s248 = ssub.s32 %s28, %s35
      %p249 = scmp.eq.s32.totalorder %s248, 0
      %s251 = sadd.s32 %s250, 1
      %s252 = scalar_select %p249, %s250, %s251
      %p255 = pneg %p249
      %p256 = scmp.eq.s32.totalorder %s20, 1
      %p257 = por %p255, %p256
      %p258 = scmp.ne.s32.totalorder %s250, %s253
      %p259 = scmp.eq.s32.totalorder %s20, 0
      %p260 = por %p258, %p259
      %p261 = scmp.ne.s32.totalorder %s250, %s253
      %p262 = scmp.eq.s32.totalorder %s25, 1
      %p263 = por %p261, %p262
      %p264 = scmp.ne.s32.totalorder %s253, %s254
      %p265 = scmp.eq.s32.totalorder %s25, 0
      %p266 = por %p264, %p265
      %p267 = scmp.ne.s32.totalorder %s253, %s254
      %p268 = scmp.eq.s32.totalorder %s26, 1
      %p269 = por %p267, %p268
      %p271 = scmp.ne.s32.totalorder %s254, %s270
      %p272 = scmp.eq.s32.totalorder %s26, 0
      %p273 = por %p271, %p272
      %s274 = ssub.s32 %s28, %s35
      %p275 = scmp.eq.s32.totalorder %s274, 0
      %s277 = sadd.s32 %s276, 1
      %s278 = scalar_select %p275, %s276, %s277
      %p281 = pneg %p275
      %p282 = scmp.eq.s32.totalorder %s20, 1
      %p283 = por %p281, %p282
      %p284 = scmp.ne.s32.totalorder %s276, %s279
      %p285 = scmp.eq.s32.totalorder %s20, 0
      %p286 = por %p284, %p285
      %p287 = scmp.ne.s32.totalorder %s276, %s279
      %p288 = scmp.eq.s32.totalorder %s25, 1
      %p289 = por %p287, %p288
      %p290 = scmp.ne.s32.totalorder %s279, %s280
      %p291 = scmp.eq.s32.totalorder %s25, 0
      %p292 = por %p290, %p291
      %p293 = scmp.ne.s32.totalorder %s279, %s280
      %p294 = scmp.eq.s32.totalorder %s26, 1
      %p295 = por %p293, %p294
      %p297 = scmp.ne.s32.totalorder %s280, %s296
      %p298 = scmp.eq.s32.totalorder %s26, 0
      %p299 = por %p297, %p298
      %s300 = ssub.s32 %s28, %s35
      %p301 = scmp.eq.s32.totalorder %s300, 0
      %s303 = sadd.s32 %s302, 1
      %s304 = scalar_select %p301, %s302, %s303
      %p307 = pneg %p301
      %p308 = scmp.eq.s32.totalorder %s20, 1
      %p309 = por %p307, %p308
      %p310 = scmp.ne.s32.totalorder %s302, %s305
      %p311 = scmp.eq.s32.totalorder %s20, 0
      %p312 = por %p310, %p311
      %p313 = scmp.ne.s32.totalorder %s302, %s305
      %p314 = scmp.eq.s32.totalorder %s25, 1
      %p315 = por %p313, %p314
      %p316 = scmp.ne.s32.totalorder %s305, %s306
      %p317 = scmp.eq.s32.totalorder %s25, 0
      %p318 = por %p316, %p317
      %p319 = scmp.ne.s32.totalorder %s305, %s306
      %p320 = scmp.eq.s32.totalorder %s26, 1
      %p321 = por %p319, %p320
      %p323 = scmp.ne.s32.totalorder %s306, %s322
      %p324 = scmp.eq.s32.totalorder %s26, 0
      %p325 = por %p323, %p324
      %s326 = ssub.s32 %s28, %s35
      %p327 = scmp.eq.s32.totalorder %s326, 0
      %s329 = sadd.s32 %s328, 1
      %s330 = scalar_select %p327, %s328, %s329
      %p333 = pneg %p327
      %p334 = scmp.eq.s32.totalorder %s20, 1
      %p335 = por %p333, %p334
      %p336 = scmp.ne.s32.totalorder %s328, %s331
      %p337 = scmp.eq.s32.totalorder %s20, 0
      %p338 = por %p336, %p337
      %p339 = scmp.ne.s32.totalorder %s328, %s331
      %p340 = scmp.eq.s32.totalorder %s25, 1
      %p341 = por %p339, %p340
      %p342 = scmp.ne.s32.totalorder %s331, %s332
      %p343 = scmp.eq.s32.totalorder %s25, 0
      %p344 = por %p342, %p343
      %p345 = scmp.ne.s32.totalorder %s331, %s332
      %p346 = scmp.eq.s32.totalorder %s26, 1
      %p347 = por %p345, %p346
      %p349 = scmp.ne.s32.totalorder %s332, %s348
      %p350 = scmp.eq.s32.totalorder %s26, 0
      %p351 = por %p349, %p350
      %s352 = ssub.s32 %s27, %s39
      %p353 = scmp.eq.s32.totalorder %s352, 0
      %s355 = sadd.s32 %s354, 1
      %s356 = scalar_select %p353, %s354, %s355
      %p359 = pneg %p353
      %p360 = scmp.eq.s32.totalorder %s20, 1
      %p361 = por %p359, %p360
      %p362 = scmp.ne.s32.totalorder %s354, %s357
      %p363 = scmp.eq.s32.totalorder %s20, 0
      %p364 = por %p362, %p363
      %p365 = scmp.ne.s32.totalorder %s354, %s357
      %p366 = scmp.eq.s32.totalorder %s25, 1
      %p367 = por %p365, %p366
      %p368 = scmp.ne.s32.totalorder %s357, %s358
      %p369 = scmp.eq.s32.totalorder %s25, 0
      %p370 = por %p368, %p369
      %p371 = scmp.ne.s32.totalorder %s357, %s358
      %p372 = scmp.eq.s32.totalorder %s26, 1
      %p373 = por %p371, %p372
      %p375 = scmp.ne.s32.totalorder %s358, %s374
      %p376 = scmp.eq.s32.totalorder %s26, 0
      %p377 = por %p375, %p376
      %p378 = scmp.le.s32.totalorder 1, %s20
      %p379 = scmp.lt.s32.totalorder %s20, 3
      %p380 = pnand %p378, %p379
      %p381 = pneg %p380
      // Predicated region
      $region9: #{tpu_custom_call.1} parent=5 // pred_check
        _
      $region10: #{tpu_custom_call.1} parent=5 // pred_check_branch
        %383 = sbr.rel (%p380) target = $region12
      $region11: #{tpu_custom_call.1} parent=5 // pred_region
        %s384 = ssub.s32 %s20, 1
        // Predicated region
        $region13: #{tpu_custom_call.1} parent=11 // pred_check
          %p385 = pneg %p58
        $region14: #{tpu_custom_call.1} parent=11 // pred_check_branch
          %387 = sbr.rel (%p385) target = $region16
        $region15: #{tpu_custom_call.1} parent=11 // pred_region
          %s388 = smul.u32 2, %s29
          %s390 = ssub.s32 256, 256
          %391 = vsyncadd [#allocation3], %s390
          %s392 = smul.addr %s388, 128
          %s393 = scalar_lea.hbm %s0, %s392
          %s394 = sshll.u32 [#allocation2], 4
          %s395 = int_to_ptr.vmem [resolvable:$true] %s394
          %400 = dma.hbm_to_vmem [thread:$0]  %s393, 256, %s395, [#allocation3], 128, 128, 8
        $region16: #{tpu_custom_call.1} parent=11 // pred_fallthru
          _
        // Predicated region
        $region17: #{tpu_custom_call.1} parent=11 // pred_check
          %p401 = pneg %p84
        $region18: #{tpu_custom_call.1} parent=11 // pred_check_branch
          %403 = sbr.rel (%p401) target = $region20
        $region19: #{tpu_custom_call.1} parent=11 // pred_region
          %s404 = smul.u32 2, %s29
          %p405 = scmp.lt.s32.totalorder %s404, 1
          %s406 = scalar_select %p405, %s404, 1
          %s407 = scalar_lea.vmem %s1, %s406
          %s408 = smul.u32 2, %s29
        $region20: #{tpu_custom_call.1} parent=11 // pred_fallthru
          _
      $region12: #{tpu_custom_call.1} parent=5 // pred_fallthru
        _
      %p409 = scmp.lt.s32.totalorder %s20, 2
      // Predicated region
      $region21: #{tpu_custom_call.1} parent=5 // pred_check
        %p410 = pneg %p409
      $region22: #{tpu_custom_call.1} parent=5 // pred_check_branch
        %412 = sbr.rel (%p410) target = $region24
      $region23: #{tpu_custom_call.1} parent=5 // pred_region
        // Predicated region
        $region25: #{tpu_custom_call.1} parent=23 // pred_check
          %p413 = pneg %p104
        $region26: #{tpu_custom_call.1} parent=23 // pred_check_branch
          %415 = sbr.rel (%p413) target = $region28
        $region27: #{tpu_custom_call.1} parent=23 // pred_region
          %p416 = scmp.lt.s32.totalorder %s28, 1
          %s417 = scalar_select %p416, %s28, 1
          %s418 = smul.addr %s417, 4
          %s419 = smul.addr %s418, 4
          %s420 = scalar_lea.vmem %s2, %s419
        $region28: #{tpu_custom_call.1} parent=23 // pred_fallthru
          _
        // Predicated region
        $region29: #{tpu_custom_call.1} parent=23 // pred_check
          %p421 = pneg %p130
        $region30: #{tpu_custom_call.1} parent=23 // pred_check_branch
          %423 = sbr.rel (%p421) target = $region32
        $region31: #{tpu_custom_call.1} parent=23 // pred_region
          %p424 = scmp.lt.s32.totalorder %s28, 1
          %s425 = scalar_select %p424, %s28, 1
          %s426 = scalar_lea.vmem %s3, %s425
        $region32: #{tpu_custom_call.1} parent=23 // pred_fallthru
          _
        // Predicated region
        $region33: #{tpu_custom_call.1} parent=23 // pred_check
          %p427 = pneg %p156
        $region34: #{tpu_custom_call.1} parent=23 // pred_check_branch
          %429 = sbr.rel (%p427) target = $region36
        $region35: #{tpu_custom_call.1} parent=23 // pred_region
          %p430 = scmp.lt.s32.totalorder %s28, 1
          %s431 = scalar_select %p430, %s28, 1
          %s432 = smul.addr %s431, 4
          %s433 = smul.addr %s432, 4
          %s434 = scalar_lea.vmem %s4, %s433
        $region36: #{tpu_custom_call.1} parent=23 // pred_fallthru
          _
        // Predicated region
        $region37: #{tpu_custom_call.1} parent=23 // pred_check
          %p435 = pneg %p182
        $region38: #{tpu_custom_call.1} parent=23 // pred_check_branch
          %437 = sbr.rel (%p435) target = $region40
        $region39: #{tpu_custom_call.1} parent=23 // pred_region
          %p438 = scmp.lt.s32.totalorder %s28, 1
          %s439 = scalar_select %p438, %s28, 1
          %s440 = scalar_lea.vmem %s5, %s439
        $region40: #{tpu_custom_call.1} parent=23 // pred_fallthru
          _
        // Predicated region
        $region41: #{tpu_custom_call.1} parent=23 // pred_check
          %p441 = pneg %p208
        $region42: #{tpu_custom_call.1} parent=23 // pred_check_branch
          %443 = sbr.rel (%p441) target = $region44
        $region43: #{tpu_custom_call.1} parent=23 // pred_region
          %p444 = scmp.lt.s32.totalorder %s28, 1
          %s445 = scalar_select %p444, %s28, 1
          %s446 = smul.addr %s445, 4
          %s447 = smul.addr %s446, 4
          %s448 = scalar_lea.vmem %s6, %s447
        $region44: #{tpu_custom_call.1} parent=23 // pred_fallthru
          _
        // Predicated region
        $region45: #{tpu_custom_call.1} parent=23 // pred_check
          %p449 = pneg %p234
        $region46: #{tpu_custom_call.1} parent=23 // pred_check_branch
          %451 = sbr.rel (%p449) target = $region48
        $region47: #{tpu_custom_call.1} parent=23 // pred_region
          %p452 = scmp.lt.s32.totalorder %s28, 1
          %s453 = scalar_select %p452, %s28, 1
          %s454 = scalar_lea.vmem %s7, %s453
        $region48: #{tpu_custom_call.1} parent=23 // pred_fallthru
          _
        // Predicated region
        $region49: #{tpu_custom_call.1} parent=23 // pred_check
          %p455 = pneg %p260
        $region50: #{tpu_custom_call.1} parent=23 // pred_check_branch
          %457 = sbr.rel (%p455) target = $region52
        $region51: #{tpu_custom_call.1} parent=23 // pred_region
          %p458 = scmp.lt.s32.totalorder %s28, 1
          %s459 = scalar_select %p458, %s28, 1
          %s460 = smul.addr %s459, 8
          %s461 = smul.addr %s460, 4
          %s462 = scalar_lea.vmem %s8, %s461
        $region52: #{tpu_custom_call.1} parent=23 // pred_fallthru
          _
        // Predicated region
        $region53: #{tpu_custom_call.1} parent=23 // pred_check
          %p463 = pneg %p286
        $region54: #{tpu_custom_call.1} parent=23 // pred_check_branch
          %465 = sbr.rel (%p463) target = $region56
        $region55: #{tpu_custom_call.1} parent=23 // pred_region
          %p466 = scmp.lt.s32.totalorder %s28, 1
          %s467 = scalar_select %p466, %s28, 1
          %s468 = scalar_lea.vmem %s9, %s467
        $region56: #{tpu_custom_call.1} parent=23 // pred_fallthru
          _
        // Predicated region
        $region57: #{tpu_custom_call.1} parent=23 // pred_check
          %p469 = pneg %p312
        $region58: #{tpu_custom_call.1} parent=23 // pred_check_branch
          %471 = sbr.rel (%p469) target = $region60
        $region59: #{tpu_custom_call.1} parent=23 // pred_region
          %p472 = scmp.lt.s32.totalorder %s28, 1
          %s473 = scalar_select %p472, %s28, 1
          %s474 = scalar_lea.vmem %s10, %s473
        $region60: #{tpu_custom_call.1} parent=23 // pred_fallthru
          _
        // Predicated region
        $region61: #{tpu_custom_call.1} parent=23 // pred_check
          %p475 = pneg %p338
        $region62: #{tpu_custom_call.1} parent=23 // pred_check_branch
          %477 = sbr.rel (%p475) target = $region64
        $region63: #{tpu_custom_call.1} parent=23 // pred_region
          %p478 = scmp.lt.s32.totalorder %s28, 1
          %s479 = scalar_select %p478, %s28, 1
          %s480 = scalar_lea.vmem %s11, %s479
        $region64: #{tpu_custom_call.1} parent=23 // pred_fallthru
          _
      $region24: #{tpu_custom_call.1} parent=5 // pred_fallthru
        _
      %p481 = scmp.le.s32.totalorder 1, %s20
      %p482 = scmp.lt.s32.totalorder %s20, 3
      %p483 = pnand %p481, %p482
      %p484 = pneg %p483
      // Predicated region
      $region65: #{tpu_custom_call.1} parent=5 // pred_check
        _
      $region66: #{tpu_custom_call.1} parent=5 // pred_check_branch
        %486 = sbr.rel (%p483) target = $region68
      $region67: #{tpu_custom_call.1} parent=5 // pred_region
        %s487 = ssub.s32 %s20, 1
        // Predicated region
        $region69: #{tpu_custom_call.1} parent=67 // pred_check
          %p488 = pneg %p58
        $region70: #{tpu_custom_call.1} parent=67 // pred_check_branch
          %490 = sbr.rel (%p488) target = $region72
        $region71: #{tpu_custom_call.1} parent=67 // pred_region
          %491 = dma.done [#allocation3], 256
        $region72: #{tpu_custom_call.1} parent=67 // pred_fallthru
          _
        %p492 = pneg %p58
        %p493 = pneg %p55
        %s494 = smul.u32 2, %s29
        %p495 = scmp.lt.s32.totalorder %s494, 1
        %s496 = scalar_select %p495, %s494, 1
        %s497 = scalar_lea.vmem %s1, %s496
        %p498 = pneg %p84
        %p499 = pneg %p81
        %p500 = scmp.lt.s32.totalorder %s30, 1
        %s501 = scalar_select %p500, %s30, 1
        %s502 = smul.addr %s501, 4
        %s503 = smul.addr %s502, 4
        %s504 = scalar_lea.vmem %s2, %s503
        %p505 = pneg %p110
        %p506 = pneg %p107
        %p507 = scmp.lt.s32.totalorder %s30, 1
        %s508 = scalar_select %p507, %s30, 1
        %s509 = scalar_lea.vmem %s3, %s508
        %p510 = pneg %p136
        %p511 = pneg %p133
        %p512 = scmp.lt.s32.totalorder %s30, 1
        %s513 = scalar_select %p512, %s30, 1
        %s514 = smul.addr %s513, 4
        %s515 = smul.addr %s514, 4
        %s516 = scalar_lea.vmem %s4, %s515
        %p517 = pneg %p162
        %p518 = pneg %p159
        %p519 = scmp.lt.s32.totalorder %s30, 1
        %s520 = scalar_select %p519, %s30, 1
        %s521 = scalar_lea.vmem %s5, %s520
        %p522 = pneg %p188
        %p523 = pneg %p185
        %p524 = scmp.lt.s32.totalorder %s30, 1
        %s525 = scalar_select %p524, %s30, 1
        %s526 = smul.addr %s525, 4
        %s527 = smul.addr %s526, 4
        %s528 = scalar_lea.vmem %s6, %s527
        %p529 = pneg %p214
        %p530 = pneg %p211
        %p531 = scmp.lt.s32.totalorder %s30, 1
        %s532 = scalar_select %p531, %s30, 1
        %s533 = scalar_lea.vmem %s7, %s532
        %p534 = pneg %p240
        %p535 = pneg %p237
        %p536 = scmp.lt.s32.totalorder %s30, 1
        %s537 = scalar_select %p536, %s30, 1
        %s538 = smul.addr %s537, 8
        %s539 = smul.addr %s538, 4
        %s540 = scalar_lea.vmem %s8, %s539
        %p541 = pneg %p266
        %p542 = pneg %p263
        %p543 = scmp.lt.s32.totalorder %s30, 1
        %s544 = scalar_select %p543, %s30, 1
        %s545 = scalar_lea.vmem %s9, %s544
        %p546 = pneg %p292
        %p547 = pneg %p289
        %p548 = scmp.lt.s32.totalorder %s30, 1
        %s549 = scalar_select %p548, %s30, 1
        %s550 = scalar_lea.vmem %s10, %s549
        %p551 = pneg %p318
        %p552 = pneg %p315
        %p553 = scmp.lt.s32.totalorder %s30, 1
        %s554 = scalar_select %p553, %s30, 1
        %s555 = scalar_lea.vmem %s11, %s554
        %p556 = pneg %p344
        %p557 = pneg %p341
        %p558 = pneg %p370
        %p559 = pneg %p367
        %s560 = smul.u32 2, %s29
        %s561 = smul.u32 2, %s29
        %p562 = scmp.lt.s32.totalorder %s561, 1
        %s563 = scalar_select %p562, %s561, 1
        %s564 = scalar_lea.vmem %s1, %s563
        %s565 = smul.u32 2, %s29
        %p566 = scmp.lt.s32.totalorder %s30, 1
        %s567 = scalar_select %p566, %s30, 1
        %s568 = smul.addr %s567, 4
        %s569 = smul.addr %s568, 4
        %s570 = scalar_lea.vmem %s2, %s569
        %p571 = scmp.lt.s32.totalorder %s30, 1
        %s572 = scalar_select %p571, %s30, 1
        %s573 = scalar_lea.vmem %s3, %s572
        %p574 = scmp.lt.s32.totalorder %s30, 1
        %s575 = scalar_select %p574, %s30, 1
        %s576 = smul.addr %s575, 4
        %s577 = smul.addr %s576, 4
        %s578 = scalar_lea.vmem %s4, %s577
        %p579 = scmp.lt.s32.totalorder %s30, 1
        %s580 = scalar_select %p579, %s30, 1
        %s581 = scalar_lea.vmem %s5, %s580
        %p582 = scmp.lt.s32.totalorder %s30, 1
        %s583 = scalar_select %p582, %s30, 1
        %s584 = smul.addr %s583, 4
        %s585 = smul.addr %s584, 4
        %s586 = scalar_lea.vmem %s6, %s585
        %p587 = scmp.lt.s32.totalorder %s30, 1
        %s588 = scalar_select %p587, %s30, 1
        %s589 = scalar_lea.vmem %s7, %s588
        %p590 = scmp.lt.s32.totalorder %s30, 1
        %s591 = scalar_select %p590, %s30, 1
        %s592 = smul.addr %s591, 8
        %s593 = smul.addr %s592, 4
        %s594 = scalar_lea.vmem %s8, %s593
        %p595 = scmp.lt.s32.totalorder %s30, 1
        %s596 = scalar_select %p595, %s30, 1
        %s597 = scalar_lea.vmem %s9, %s596
        %p598 = scmp.lt.s32.totalorder %s30, 1
        %s599 = scalar_select %p598, %s30, 1
        %s600 = scalar_lea.vmem %s10, %s599
        %p601 = scmp.lt.s32.totalorder %s30, 1
        %s602 = scalar_select %p601, %s30, 1
        %s603 = scalar_lea.vmem %s11, %s602
        %s604 = smul.u32 2, %s29
        %p606 = scmp.eq.s32.totalorder %s30, 0
        // Predicated region
        $region73: #{tpu_custom_call.1} parent=67 // pred_check
          %p607 = pneg %p606
        $region74: #{tpu_custom_call.1} parent=67 // pred_check_branch
          %609 = sbr.rel (%p607) target = $region76
        $region75: #{tpu_custom_call.1} parent=67 // pred_region
          %v610 = vld [vmem:[#allocation2] sm:$0xff]
          %v611 = vld [vmem:[#allocation2 + $0x8] sm:$0xff]
          %vm612 = vcmask 261120
          %613 = vst.msk [vmem:[#allocation5] sm:$0xff] %vm612, %v610
          %614 = vst.msk [vmem:[#allocation5 + $0x8] sm:$0xff] %vm612, %v611
        $region76: #{tpu_custom_call.1} parent=67 // pred_fallthru
          _
        %v615 = vld [vmem:[#allocation5] sm:$0xff]
        %v616 = vld [vmem:[#allocation5 + $0x8] sm:$0xff]
        %v617 = vpack.c.bf16 %v616, %v615
        %v618 = vld [vmem:[%s570] sm:$0xf]
        %v619 = vld [vmem:[%s570 + $0x4] sm:$0xf]
        %v620 = vld [vmem:[%s570 + $0x8] sm:$0xf]
        %v621 = vld [vmem:[%s570 + $0xc] sm:$0xf]
        %v622 = vld [vmem:[%s573] sm:$0x1]
        %v624 = vlaneseq
        %v625 = vshrl.u32 %v624, 7
        %v626 = vsub.s32 0, %v625
        %v627 = vrot.slane %v622, %v626
        %v633 = vunpack.c.l.b16 %v618
        %v634 = vunpack.c.l.b16 %v619
        %v635 = vunpack.c.l.b16 %v620
        %v636 = vunpack.c.l.b16 %v621
        %v637 = vpack.c.b16 %v634, %v633
        %v638 = vpack.c.b16 %v636, %v635
        %vm641 = vcmask 261120
        %v643 = vsel %vm641, %v617, 0
        %645 = vmatprep.subr.bf16.mxu0 0
        %646 = vmatpush1.bf16.msra.mxu0 %v637
        %647 = vmatprep.subr.bf16.mxu0 0
        %648 = vmatpush1.bf16.msra.mxu0 %v638
        %649 = vmatprep.subr.bf16.mxu0 0
        %650 = vmatpush1.bf16.msra.mxu0 0
        %651 = vmatprep.subr.bf16.mxu0 0
        %652 = vmatpush1.bf16.msra.mxu0 0
        %653 = vmatprep.subr.bf16.mxu0 0
        %654 = vmatpush1.bf16.msra.mxu0 0
        %655 = vmatprep.subr.bf16.mxu0 0
        %656 = vmatpush1.bf16.msra.mxu0 0
        %657 = vmatprep.subr.bf16.mxu0 0
        %658 = vmatpush1.bf16.msra.mxu0 0
        %659 = vmatprep.subr.bf16.mxu0 0
        %660 = vmatpush1.bf16.msra.mxu0 0
        %661 = vmatprep.subr.bf16.mxu0 0
        %662 = vmatpush1.bf16.msra.mxu0 0
        %663 = vmatprep.subr.bf16.mxu0 0
        %664 = vmatpush1.bf16.msra.mxu0 0
        %665 = vmatprep.subr.bf16.mxu0 0
        %666 = vmatpush1.bf16.msra.mxu0 0
        %667 = vmatprep.subr.bf16.mxu0 0
        %668 = vmatpush1.bf16.msra.mxu0 0
        %669 = vmatprep.subr.bf16.mxu0 0
        %670 = vmatpush1.bf16.msra.mxu0 0
        %671 = vmatprep.subr.bf16.mxu0 0
        %672 = vmatpush1.bf16.msra.mxu0 0
        %673 = vmatprep.subr.bf16.mxu0 0
        %674 = vmatpush1.bf16.msra.mxu0 0
        %675 = vmatprep.subr.bf16.mxu0 0
        %676 = vmatpush1.bf16.msra.mxu0 0
        %677 = vmatprep.mubr.bf16.mxu0 0
        %678 = vmatmul.mubr.bf16.gmra.mrb[0].mxu0 %v643
        %v679 = vpop.f32.mrb[0].mxu0
        %v680 = vadd.f32 %v627, %v679
        %v681 = vpop.f32.mrb[0].mxu0
        %v682 = vpop.f32.mrb[0].mxu0
        %v683 = vadd.f32 %v627, %v682
        %v684 = vpop.f32.mrb[0].mxu0
        %685 = vdwg.mxu0
        %v686 = vld [vmem:[%s564] sm:$0x1]
        %v687 = vld [vmem:[%s564 + $0x1] sm:$0x1]
        %vm688 = vcmp.ne.f32.partialorder %v686, 0.0
        %vm689 = vcmp.ne.f32.partialorder %v687, 0.0
        %v690 = vpack.c.bf16 %v680, %v680
        %v691 = vpack.c.bf16 %v683, %v683
        %693 = vrot.lane.b32.xlu0 %v690, 96
        %v694 = vpop.permute.xlu0 %693
        %vm695 = vcmask 64512
        %v697 = vsel %vm695, %v690, 0
        %v700 = vsel %vm695, %v694, 0
        %702 = vmatprep.subr.bf16.mxu0 0
        %703 = vmatpush1.bf16.xpose.msra.mxu0 %v700
        %704 = vmatprep.subr.bf16.mxu0 0
        %705 = vmatpush1.bf16.xpose.msra.mxu0 0
        %706 = vmatprep.subr.bf16.mxu0 0
        %707 = vmatpush1.bf16.xpose.msra.mxu0 0
        %708 = vmatprep.subr.bf16.mxu0 0
        %709 = vmatpush1.bf16.xpose.msra.mxu0 0
        %710 = vmatprep.subr.bf16.mxu0 0
        %711 = vmatpush1.bf16.xpose.msra.mxu0 0
        %712 = vmatprep.subr.bf16.mxu0 0
        %713 = vmatpush1.bf16.xpose.msra.mxu0 0
        %714 = vmatprep.subr.bf16.mxu0 0
        %715 = vmatpush1.bf16.xpose.msra.mxu0 0
        %716 = vmatprep.subr.bf16.mxu0 0
        %717 = vmatpush1.bf16.xpose.msra.mxu0 0
        %718 = vmatprep.subr.bf16.mxu0 0
        %719 = vmatpush1.bf16.xpose.msra.mxu0 0
        %720 = vmatprep.subr.bf16.mxu0 0
        %721 = vmatpush1.bf16.xpose.msra.mxu0 0
        %722 = vmatprep.subr.bf16.mxu0 0
        %723 = vmatpush1.bf16.xpose.msra.mxu0 0
        %724 = vmatprep.subr.bf16.mxu0 0
        %725 = vmatpush1.bf16.xpose.msra.mxu0 0
        %726 = vmatprep.subr.bf16.mxu0 0
        %727 = vmatpush1.bf16.xpose.msra.mxu0 0
        %728 = vmatprep.subr.bf16.mxu0 0
        %729 = vmatpush1.bf16.xpose.msra.mxu0 0
        %730 = vmatprep.subr.bf16.mxu0 0
        %731 = vmatpush1.bf16.xpose.msra.mxu0 0
        %732 = vmatprep.subr.bf16.mxu0 0
        %733 = vmatpush1.bf16.xpose.msra.mxu0 0
        %734 = vmatprep.mubr.bf16.mxu0 0
        %735 = vmatmul.mubr.bf16.gmra.mrb[0].mxu0 %v697
        %v736 = vpop.f32.mrb[0].mxu0
        %v737 = vadd.f32 0.0, %v736
        %v738 = vpop.f32.mrb[0].mxu0
        %v739 = vpop.f32.mrb[0].mxu0
        %v740 = vpop.f32.mrb[0].mxu0
        %741 = vdwg.mxu0
        %743 = vrot.lane.b32.xlu0 %v691, 96
        %v744 = vpop.permute.xlu0 %743
        %v746 = vsel %vm695, %v691, 0
        %v749 = vsel %vm695, %v744, 0
        %751 = vmatprep.subr.bf16.mxu0 0
        %752 = vmatpush1.bf16.xpose.msra.mxu0 %v749
        %753 = vmatprep.subr.bf16.mxu0 0
        %754 = vmatpush1.bf16.xpose.msra.mxu0 0
        %755 = vmatprep.subr.bf16.mxu0 0
        %756 = vmatpush1.bf16.xpose.msra.mxu0 0
        %757 = vmatprep.subr.bf16.mxu0 0
        %758 = vmatpush1.bf16.xpose.msra.mxu0 0
        %759 = vmatprep.subr.bf16.mxu0 0
        %760 = vmatpush1.bf16.xpose.msra.mxu0 0
        %761 = vmatprep.subr.bf16.mxu0 0
        %762 = vmatpush1.bf16.xpose.msra.mxu0 0
        %763 = vmatprep.subr.bf16.mxu0 0
        %764 = vmatpush1.bf16.xpose.msra.mxu0 0
        %765 = vmatprep.subr.bf16.mxu0 0
        %766 = vmatpush1.bf16.xpose.msra.mxu0 0
        %767 = vmatprep.subr.bf16.mxu0 0
        %768 = vmatpush1.bf16.xpose.msra.mxu0 0
        %769 = vmatprep.subr.bf16.mxu0 0
        %770 = vmatpush1.bf16.xpose.msra.mxu0 0
        %771 = vmatprep.subr.bf16.mxu0 0
        %772 = vmatpush1.bf16.xpose.msra.mxu0 0
        %773 = vmatprep.subr.bf16.mxu0 0
        %774 = vmatpush1.bf16.xpose.msra.mxu0 0
        %775 = vmatprep.subr.bf16.mxu0 0
        %776 = vmatpush1.bf16.xpose.msra.mxu0 0
        %777 = vmatprep.subr.bf16.mxu0 0
        %778 = vmatpush1.bf16.xpose.msra.mxu0 0
        %779 = vmatprep.subr.bf16.mxu0 0
        %780 = vmatpush1.bf16.xpose.msra.mxu0 0
        %781 = vmatprep.subr.bf16.mxu0 0
        %782 = vmatpush1.bf16.xpose.msra.mxu0 0
        %783 = vmatprep.mubr.bf16.mxu0 0
        %784 = vmatmul.mubr.bf16.gmra.mrb[0].mxu0 %v746
        %v785 = vpop.f32.mrb[0].mxu0
        %v786 = vadd.f32 0.0, %v785
        %v787 = vpop.f32.mrb[0].mxu0
        %v788 = vpop.f32.mrb[0].mxu0
        %v789 = vpop.f32.mrb[0].mxu0
        %790 = vdwg.mxu0
        %v791 = vsel %vm688, 1, 0
        %v792 = vsel %vm689, 1, 0
        %v793 = vlaneseq
        %v794 = vshrl.u32 %v793, 7
        %v795 = vsub.s32 0, %v794
        %v796 = vrot.slane %v791, %v795
        %v797 = vlaneseq
        %v798 = vshrl.u32 %v797, 7
        %v799 = vsub.s32 0, %v798
        %v800 = vrot.slane %v792, %v799
        %vm801 = vcmp.eq.s32.totalorder %v796, 1
        %vm802 = vcmp.eq.s32.totalorder %v800, 1
        %v803 = vsel %vm801, %v737, -1e+10
        %v804 = vsel %vm802, %v786, -1e+10
        %v805 = vsel %vm695, %v803, -inf
        %806 = vmax.xlane.f32.xlu0 %v805
        %v807 = vpop.xlane.xlu0 %806
        %v808 = vsel %vm695, %v804, -inf
        %809 = vmax.xlane.f32.xlu0 %v808
        %v810 = vpop.xlane.xlu0 %809
        %v811 = vsub.f32 %v803, %v807
        %v812 = vsub.f32 %v804, %v810
        %v813 = vmul.f32 %v811, 1.442695
        %v814 = vpow.pop %v813
        %v815 = vmul.f32 %v812, 1.442695
        %v816 = vpow.pop %v815
        %v817 = vsel %vm695, %v814, 0.0
        %818 = vadd.xlane.f32.xlu0 %v817
        %v819 = vpop.xlane.xlu0 %818
        %v820 = vsel %vm695, %v816, 0.0
        %821 = vadd.xlane.f32.xlu0 %v820
        %v822 = vpop.xlane.xlu0 %821
        %v823 = vrcp.pop %v819
        %v824 = vrcp.pop %v822
        %v825 = vmul.f32 %v814, %v823
        %v826 = vmul.f32 %v816, %v824
        %v827 = vpack.c.bf16 %v825, %v825
        %v828 = vpack.c.bf16 %v826, %v826
        %829 = vrot.lane.b32.xlu0 %v690, 64
        %v830 = vpop.permute.xlu0 %829
        %v832 = vsel %vm695, %v827, 0
        %vm834 = vcmask 1043456
        %v836 = vsel %vm834, %v830, 0
        %838 = vmatprep.subr.bf16.mxu0 0
        %839 = vmatpush1.bf16.msra.mxu0 %v836
        %840 = vmatprep.subr.bf16.mxu0 0
        %841 = vmatpush1.bf16.msra.mxu0 0
        %842 = vmatprep.subr.bf16.mxu0 0
        %843 = vmatpush1.bf16.msra.mxu0 0
        %844 = vmatprep.subr.bf16.mxu0 0
        %845 = vmatpush1.bf16.msra.mxu0 0
        %846 = vmatprep.subr.bf16.mxu0 0
        %847 = vmatpush1.bf16.msra.mxu0 0
        %848 = vmatprep.subr.bf16.mxu0 0
        %849 = vmatpush1.bf16.msra.mxu0 0
        %850 = vmatprep.subr.bf16.mxu0 0
        %851 = vmatpush1.bf16.msra.mxu0 0
        %852 = vmatprep.subr.bf16.mxu0 0
        %853 = vmatpush1.bf16.msra.mxu0 0
        %854 = vmatprep.subr.bf16.mxu0 0
        %855 = vmatpush1.bf16.msra.mxu0 0
        %856 = vmatprep.subr.bf16.mxu0 0
        %857 = vmatpush1.bf16.msra.mxu0 0
        %858 = vmatprep.subr.bf16.mxu0 0
        %859 = vmatpush1.bf16.msra.mxu0 0
        %860 = vmatprep.subr.bf16.mxu0 0
        %861 = vmatpush1.bf16.msra.mxu0 0
        %862 = vmatprep.subr.bf16.mxu0 0
        %863 = vmatpush1.bf16.msra.mxu0 0
        %864 = vmatprep.subr.bf16.mxu0 0
        %865 = vmatpush1.bf16.msra.mxu0 0
        %866 = vmatprep.subr.bf16.mxu0 0
        %867 = vmatpush1.bf16.msra.mxu0 0
        %868 = vmatprep.subr.bf16.mxu0 0
        %869 = vmatpush1.bf16.msra.mxu0 0
        %870 = vmatprep.mubr.bf16.mxu0 0
        %871 = vmatmul.mubr.bf16.gmra.mrb[0].mxu0 %v832
        %v872 = vpop.f32.mrb[0].mxu0
        %v873 = vadd.f32 0.0, %v872
        %v874 = vpop.f32.mrb[0].mxu0
        %v875 = vpop.f32.mrb[0].mxu0
        %v876 = vpop.f32.mrb[0].mxu0
        %877 = vdwg.mxu0
        %878 = vrot.lane.b32.xlu0 %v691, 64
        %v879 = vpop.permute.xlu0 %878
        %v881 = vsel %vm695, %v828, 0
        %v884 = vsel %vm834, %v879, 0
        %886 = vmatprep.subr.bf16.mxu0 0
        %887 = vmatpush1.bf16.msra.mxu0 %v884
        %888 = vmatprep.subr.bf16.mxu0 0
        %889 = vmatpush1.bf16.msra.mxu0 0
        %890 = vmatprep.subr.bf16.mxu0 0
        %891 = vmatpush1.bf16.msra.mxu0 0
        %892 = vmatprep.subr.bf16.mxu0 0
        %893 = vmatpush1.bf16.msra.mxu0 0
        %894 = vmatprep.subr.bf16.mxu0 0
        %895 = vmatpush1.bf16.msra.mxu0 0
        %896 = vmatprep.subr.bf16.mxu0 0
        %897 = vmatpush1.bf16.msra.mxu0 0
        %898 = vmatprep.subr.bf16.mxu0 0
        %899 = vmatpush1.bf16.msra.mxu0 0
        %900 = vmatprep.subr.bf16.mxu0 0
        %901 = vmatpush1.bf16.msra.mxu0 0
        %902 = vmatprep.subr.bf16.mxu0 0
        %903 = vmatpush1.bf16.msra.mxu0 0
        %904 = vmatprep.subr.bf16.mxu0 0
        %905 = vmatpush1.bf16.msra.mxu0 0
        %906 = vmatprep.subr.bf16.mxu0 0
        %907 = vmatpush1.bf16.msra.mxu0 0
        %908 = vmatprep.subr.bf16.mxu0 0
        %909 = vmatpush1.bf16.msra.mxu0 0
        %910 = vmatprep.subr.bf16.mxu0 0
        %911 = vmatpush1.bf16.msra.mxu0 0
        %912 = vmatprep.subr.bf16.mxu0 0
        %913 = vmatpush1.bf16.msra.mxu0 0
        %914 = vmatprep.subr.bf16.mxu0 0
        %915 = vmatpush1.bf16.msra.mxu0 0
        %916 = vmatprep.subr.bf16.mxu0 0
        %917 = vmatpush1.bf16.msra.mxu0 0
        %918 = vmatprep.mubr.bf16.mxu0 0
        %919 = vmatmul.mubr.bf16.gmra.mrb[0].mxu0 %v881
        %v920 = vpop.f32.mrb[0].mxu0
        %v921 = vadd.f32 0.0, %v920
        %v922 = vpop.f32.mrb[0].mxu0
        %v923 = vpop.f32.mrb[0].mxu0
        %v924 = vpop.f32.mrb[0].mxu0
        %925 = vdwg.mxu0
        %926 = vrot.lane.b32.xlu0 %v690, 120
        %v927 = vpop.permute.xlu0 %926
        %928 = vrot.lane.b32.xlu0 %v690, 88
        %v929 = vpop.permute.xlu0 %928
        %v931 = vsel %vm695, %v927, 0
        %v934 = vsel %vm695, %v929, 0
        %936 = vmatprep.subr.bf16.mxu0 0
        %937 = vmatpush1.bf16.xpose.msra.mxu0 %v934
        %938 = vmatprep.subr.bf16.mxu0 0
        %939 = vmatpush1.bf16.xpose.msra.mxu0 0
        %940 = vmatprep.subr.bf16.mxu0 0
        %941 = vmatpush1.bf16.xpose.msra.mxu0 0
        %942 = vmatprep.subr.bf16.mxu0 0
        %943 = vmatpush1.bf16.xpose.msra.mxu0 0
        %944 = vmatprep.subr.bf16.mxu0 0
        %945 = vmatpush1.bf16.xpose.msra.mxu0 0
        %946 = vmatprep.subr.bf16.mxu0 0
        %947 = vmatpush1.bf16.xpose.msra.mxu0 0
        %948 = vmatprep.subr.bf16.mxu0 0
        %949 = vmatpush1.bf16.xpose.msra.mxu0 0
        %950 = vmatprep.subr.bf16.mxu0 0
        %951 = vmatpush1.bf16.xpose.msra.mxu0 0
        %952 = vmatprep.subr.bf16.mxu0 0
        %953 = vmatpush1.bf16.xpose.msra.mxu0 0
        %954 = vmatprep.subr.bf16.mxu0 0
        %955 = vmatpush1.bf16.xpose.msra.mxu0 0
        %956 = vmatprep.subr.bf16.mxu0 0
        %957 = vmatpush1.bf16.xpose.msra.mxu0 0
        %958 = vmatprep.subr.bf16.mxu0 0
        %959 = vmatpush1.bf16.xpose.msra.mxu0 0
        %960 = vmatprep.subr.bf16.mxu0 0
        %961 = vmatpush1.bf16.xpose.msra.mxu0 0
        %962 = vmatprep.subr.bf16.mxu0 0
        %963 = vmatpush1.bf16.xpose.msra.mxu0 0
        %964 = vmatprep.subr.bf16.mxu0 0
        %965 = vmatpush1.bf16.xpose.msra.mxu0 0
        %966 = vmatprep.subr.bf16.mxu0 0
        %967 = vmatpush1.bf16.xpose.msra.mxu0 0
        %968 = vmatprep.mubr.bf16.mxu0 0
        %969 = vmatmul.mubr.bf16.gmra.mrb[0].mxu0 %v931
        %v970 = vpop.f32.mrb[0].mxu0
        %v971 = vadd.f32 0.0, %v970
        %v972 = vpop.f32.mrb[0].mxu0
        %v973 = vpop.f32.mrb[0].mxu0
        %v974 = vpop.f32.mrb[0].mxu0
        %975 = vdwg.mxu0
        %976 = vrot.lane.b32.xlu0 %v691, 120
        %v977 = vpop.permute.xlu0 %976
        %978 = vrot.lane.b32.xlu0 %v691, 88
        %v979 = vpop.permute.xlu0 %978
        %v981 = vsel %vm695, %v977, 0
        %v984 = vsel %vm695, %v979, 0
        %986 = vmatprep.subr.bf16.mxu0 0
        %987 = vmatpush1.bf16.xpose.msra.mxu0 %v984
        %988 = vmatprep.subr.bf16.mxu0 0
        %989 = vmatpush1.bf16.xpose.msra.mxu0 0
        %990 = vmatprep.subr.bf16.mxu0 0
        %991 = vmatpush1.bf16.xpose.msra.mxu0 0
        %992 = vmatprep.subr.bf16.mxu0 0
        %993 = vmatpush1.bf16.xpose.msra.mxu0 0
        %994 = vmatprep.subr.bf16.mxu0 0
        %995 = vmatpush1.bf16.xpose.msra.mxu0 0
        %996 = vmatprep.subr.bf16.mxu0 0
        %997 = vmatpush1.bf16.xpose.msra.mxu0 0
        %998 = vmatprep.subr.bf16.mxu0 0
        %999 = vmatpush1.bf16.xpose.msra.mxu0 0
        %1000 = vmatprep.subr.bf16.mxu0 0
        %1001 = vmatpush1.bf16.xpose.msra.mxu0 0
        %1002 = vmatprep.subr.bf16.mxu0 0
        %1003 = vmatpush1.bf16.xpose.msra.mxu0 0
        %1004 = vmatprep.subr.bf16.mxu0 0
        %1005 = vmatpush1.bf16.xpose.msra.mxu0 0
        %1006 = vmatprep.subr.bf16.mxu0 0
        %1007 = vmatpush1.bf16.xpose.msra.mxu0 0
        %1008 = vmatprep.subr.bf16.mxu0 0
        %1009 = vmatpush1.bf16.xpose.msra.mxu0 0
        %1010 = vmatprep.subr.bf16.mxu0 0
        %1011 = vmatpush1.bf16.xpose.msra.mxu0 0
        %1012 = vmatprep.subr.bf16.mxu0 0
        %1013 = vmatpush1.bf16.xpose.msra.mxu0 0
        %1014 = vmatprep.subr.bf16.mxu0 0
        %1015 = vmatpush1.bf16.xpose.msra.mxu0 0
        %1016 = vmatprep.subr.bf16.mxu0 0
        %1017 = vmatpush1.bf16.xpose.msra.mxu0 0
        %1018 = vmatprep.mubr.bf16.mxu0 0
        %1019 = vmatmul.mubr.bf16.gmra.mrb[0].mxu0 %v981
        %v1020 = vpop.f32.mrb[0].mxu0
        %v1021 = vadd.f32 0.0, %v1020
        %v1022 = vpop.f32.mrb[0].mxu0
        %v1023 = vpop.f32.mrb[0].mxu0
        %v1024 = vpop.f32.mrb[0].mxu0
        %1025 = vdwg.mxu0
        %v1026 = vsel %vm801, %v971, -1e+10
        %v1027 = vsel %vm802, %v1021, -1e+10
        %v1028 = vsel %vm695, %v1026, -inf
        %1029 = vmax.xlane.f32.xlu0 %v1028
        %v1030 = vpop.xlane.xlu0 %1029
        %v1031 = vsel %vm695, %v1027, -inf
        %1032 = vmax.xlane.f32.xlu0 %v1031
        %v1033 = vpop.xlane.xlu0 %1032
        %v1034 = vsub.f32 %v1026, %v1030
        %v1035 = vsub.f32 %v1027, %v1033
        %v1036 = vmul.f32 %v1034, 1.442695
        %v1037 = vpow.pop %v1036
        %v1038 = vmul.f32 %v1035, 1.442695
        %v1039 = vpow.pop %v1038
        %v1040 = vsel %vm695, %v1037, 0.0
        %1041 = vadd.xlane.f32.xlu0 %v1040
        %v1042 = vpop.xlane.xlu0 %1041
        %v1043 = vsel %vm695, %v1039, 0.0
        %1044 = vadd.xlane.f32.xlu0 %v1043
        %v1045 = vpop.xlane.xlu0 %1044
        %v1046 = vrcp.pop %v1042
        %v1047 = vrcp.pop %v1045
        %v1048 = vmul.f32 %v1037, %v1046
        %v1049 = vmul.f32 %v1039, %v1047
        %v1050 = vpack.c.bf16 %v1048, %v1048
        %v1051 = vpack.c.bf16 %v1049, %v1049
        %1052 = vrot.lane.b32.xlu0 %v690, 56
        %v1053 = vpop.permute.xlu0 %1052
        %v1055 = vsel %vm695, %v1050, 0
        %v1058 = vsel %vm834, %v1053, 0
        %1060 = vmatprep.subr.bf16.mxu0 0
        %1061 = vmatpush1.bf16.msra.mxu0 %v1058
        %1062 = vmatprep.subr.bf16.mxu0 0
        %1063 = vmatpush1.bf16.msra.mxu0 0
        %1064 = vmatprep.subr.bf16.mxu0 0
        %1065 = vmatpush1.bf16.msra.mxu0 0
        %1066 = vmatprep.subr.bf16.mxu0 0
        %1067 = vmatpush1.bf16.msra.mxu0 0
        %1068 = vmatprep.subr.bf16.mxu0 0
        %1069 = vmatpush1.bf16.msra.mxu0 0
        %1070 = vmatprep.subr.bf16.mxu0 0
        %1071 = vmatpush1.bf16.msra.mxu0 0
        %1072 = vmatprep.subr.bf16.mxu0 0
        %1073 = vmatpush1.bf16.msra.mxu0 0
        %1074 = vmatprep.subr.bf16.mxu0 0
        %1075 = vmatpush1.bf16.msra.mxu0 0
        %1076 = vmatprep.subr.bf16.mxu0 0
        %1077 = vmatpush1.bf16.msra.mxu0 0
        %1078 = vmatprep.subr.bf16.mxu0 0
        %1079 = vmatpush1.bf16.msra.mxu0 0
        %1080 = vmatprep.subr.bf16.mxu0 0
        %1081 = vmatpush1.bf16.msra.mxu0 0
        %1082 = vmatprep.subr.bf16.mxu0 0
        %1083 = vmatpush1.bf16.msra.mxu0 0
        %1084 = vmatprep.subr.bf16.mxu0 0
        %1085 = vmatpush1.bf16.msra.mxu0 0
        %1086 = vmatprep.subr.bf16.mxu0 0
        %1087 = vmatpush1.bf16.msra.mxu0 0
        %1088 = vmatprep.subr.bf16.mxu0 0
        %1089 = vmatpush1.bf16.msra.mxu0 0
        %1090 = vmatprep.subr.bf16.mxu0 0
        %1091 = vmatpush1.bf16.msra.mxu0 0
        %1092 = vmatprep.mubr.bf16.mxu0 0
        %1093 = vmatmul.mubr.bf16.gmra.mrb[0].mxu0 %v1055
        %v1094 = vpop.f32.mrb[0].mxu0
        %v1095 = vadd.f32 0.0, %v1094
        %v1096 = vpop.f32.mrb[0].mxu0
        %v1097 = vpop.f32.mrb[0].mxu0
        %v1098 = vpop.f32.mrb[0].mxu0
        %1099 = vdwg.mxu0
        %1100 = vrot.lane.b32.xlu0 %v691, 56
        %v1101 = vpop.permute.xlu0 %1100
        %v1103 = vsel %vm695, %v1051, 0
        %v1106 = vsel %vm834, %v1101, 0
        %1108 = vmatprep.subr.bf16.mxu0 0
        %1109 = vmatpush1.bf16.msra.mxu0 %v1106
        %1110 = vmatprep.subr.bf16.mxu0 0
        %1111 = vmatpush1.bf16.msra.mxu0 0
        %1112 = vmatprep.subr.bf16.mxu0 0
        %1113 = vmatpush1.bf16.msra.mxu0 0
        %1114 = vmatprep.subr.bf16.mxu0 0
        %1115 = vmatpush1.bf16.msra.mxu0 0
        %1116 = vmatprep.subr.bf16.mxu0 0
        %1117 = vmatpush1.bf16.msra.mxu0 0
        %1118 = vmatprep.subr.bf16.mxu0 0
        %1119 = vmatpush1.bf16.msra.mxu0 0
        %1120 = vmatprep.subr.bf16.mxu0 0
        %1121 = vmatpush1.bf16.msra.mxu0 0
        %1122 = vmatprep.subr.bf16.mxu0 0
        %1123 = vmatpush1.bf16.msra.mxu0 0
        %1124 = vmatprep.subr.bf16.mxu0 0
        %1125 = vmatpush1.bf16.msra.mxu0 0
        %1126 = vmatprep.subr.bf16.mxu0 0
        %1127 = vmatpush1.bf16.msra.mxu0 0
        %1128 = vmatprep.subr.bf16.mxu0 0
        %1129 = vmatpush1.bf16.msra.mxu0 0
        %1130 = vmatprep.subr.bf16.mxu0 0
        %1131 = vmatpush1.bf16.msra.mxu0 0
        %1132 = vmatprep.subr.bf16.mxu0 0
        %1133 = vmatpush1.bf16.msra.mxu0 0
        %1134 = vmatprep.subr.bf16.mxu0 0
        %1135 = vmatpush1.bf16.msra.mxu0 0
        %1136 = vmatprep.subr.bf16.mxu0 0
        %1137 = vmatpush1.bf16.msra.mxu0 0
        %1138 = vmatprep.subr.bf16.mxu0 0
        %1139 = vmatpush1.bf16.msra.mxu0 0
        %1140 = vmatprep.mubr.bf16.mxu0 0
        %1141 = vmatmul.mubr.bf16.gmra.mrb[0].mxu0 %v1103
        %v1142 = vpop.f32.mrb[0].mxu0
        %v1143 = vadd.f32 0.0, %v1142
        %v1144 = vpop.f32.mrb[0].mxu0
        %v1145 = vpop.f32.mrb[0].mxu0
        %v1146 = vpop.f32.mrb[0].mxu0
        %1147 = vdwg.mxu0
        %1148 = vrot.lane.b32.xlu0 %v690, 112
        %v1149 = vpop.permute.xlu0 %1148
        %1150 = vrot.lane.b32.xlu0 %v690, 80
        %v1151 = vpop.permute.xlu0 %1150
        %v1153 = vsel %vm695, %v1149, 0
        %v1156 = vsel %vm695, %v1151, 0
        %1158 = vmatprep.subr.bf16.mxu0 0
        %1159 = vmatpush1.bf16.xpose.msra.mxu0 %v1156
        %1160 = vmatprep.subr.bf16.mxu0 0
        %1161 = vmatpush1.bf16.xpose.msra.mxu0 0
        %1162 = vmatprep.subr.bf16.mxu0 0
        %1163 = vmatpush1.bf16.xpose.msra.mxu0 0
        %1164 = vmatprep.subr.bf16.mxu0 0
        %1165 = vmatpush1.bf16.xpose.msra.mxu0 0
        %1166 = vmatprep.subr.bf16.mxu0 0
        %1167 = vmatpush1.bf16.xpose.msra.mxu0 0
        %1168 = vmatprep.subr.bf16.mxu0 0
        %1169 = vmatpush1.bf16.xpose.msra.mxu0 0
        %1170 = vmatprep.subr.bf16.mxu0 0
        %1171 = vmatpush1.bf16.xpose.msra.mxu0 0
        %1172 = vmatprep.subr.bf16.mxu0 0
        %1173 = vmatpush1.bf16.xpose.msra.mxu0 0
        %1174 = vmatprep.subr.bf16.mxu0 0
        %1175 = vmatpush1.bf16.xpose.msra.mxu0 0
        %1176 = vmatprep.subr.bf16.mxu0 0
        %1177 = vmatpush1.bf16.xpose.msra.mxu0 0
        %1178 = vmatprep.subr.bf16.mxu0 0
        %1179 = vmatpush1.bf16.xpose.msra.mxu0 0
        %1180 = vmatprep.subr.bf16.mxu0 0
        %1181 = vmatpush1.bf16.xpose.msra.mxu0 0
        %1182 = vmatprep.subr.bf16.mxu0 0
        %1183 = vmatpush1.bf16.xpose.msra.mxu0 0
        %1184 = vmatprep.subr.bf16.mxu0 0
        %1185 = vmatpush1.bf16.xpose.msra.mxu0 0
        %1186 = vmatprep.subr.bf16.mxu0 0
        %1187 = vmatpush1.bf16.xpose.msra.mxu0 0
        %1188 = vmatprep.subr.bf16.mxu0 0
        %1189 = vmatpush1.bf16.xpose.msra.mxu0 0
        %1190 = vmatprep.mubr.bf16.mxu0 0
        %1191 = vmatmul.mubr.bf16.gmra.mrb[0].mxu0 %v1153
        %v1192 = vpop.f32.mrb[0].mxu0
        %v1193 = vadd.f32 0.0, %v1192
        %v1194 = vpop.f32.mrb[0].mxu0
        %v1195 = vpop.f32.mrb[0].mxu0
        %v1196 = vpop.f32.mrb[0].mxu0
        %1197 = vdwg.mxu0
        %1198 = vrot.lane.b32.xlu0 %v691, 112
        %v1199 = vpop.permute.xlu0 %1198
        %1200 = vrot.lane.b32.xlu0 %v691, 80
        %v1201 = vpop.permute.xlu0 %1200
        %v1203 = vsel %vm695, %v1199, 0
        %v1206 = vsel %vm695, %v1201, 0
        %1208 = vmatprep.subr.bf16.mxu0 0
        %1209 = vmatpush1.bf16.xpose.msra.mxu0 %v1206
        %1210 = vmatprep.subr.bf16.mxu0 0
        %1211 = vmatpush1.bf16.xpose.msra.mxu0 0
        %1212 = vmatprep.subr.bf16.mxu0 0
        %1213 = vmatpush1.bf16.xpose.msra.mxu0 0
        %1214 = vmatprep.subr.bf16.mxu0 0
        %1215 = vmatpush1.bf16.xpose.msra.mxu0 0
        %1216 = vmatprep.subr.bf16.mxu0 0
        %1217 = vmatpush1.bf16.xpose.msra.mxu0 0
        %1218 = vmatprep.subr.bf16.mxu0 0
        %1219 = vmatpush1.bf16.xpose.msra.mxu0 0
        %1220 = vmatprep.subr.bf16.mxu0 0
        %1221 = vmatpush1.bf16.xpose.msra.mxu0 0
        %1222 = vmatprep.subr.bf16.mxu0 0
        %1223 = vmatpush1.bf16.xpose.msra.mxu0 0
        %1224 = vmatprep.subr.bf16.mxu0 0
        %1225 = vmatpush1.bf16.xpose.msra.mxu0 0
        %1226 = vmatprep.subr.bf16.mxu0 0
        %1227 = vmatpush1.bf16.xpose.msra.mxu0 0
        %1228 = vmatprep.subr.bf16.mxu0 0
        %1229 = vmatpush1.bf16.xpose.msra.mxu0 0
        %1230 = vmatprep.subr.bf16.mxu0 0
        %1231 = vmatpush1.bf16.xpose.msra.mxu0 0
        %1232 = vmatprep.subr.bf16.mxu0 0
        %1233 = vmatpush1.bf16.xpose.msra.mxu0 0
        %1234 = vmatprep.subr.bf16.mxu0 0
        %1235 = vmatpush1.bf16.xpose.msra.mxu0 0
        %1236 = vmatprep.subr.bf16.mxu0 0
        %1237 = vmatpush1.bf16.xpose.msra.mxu0 0
        %1238 = vmatprep.subr.bf16.mxu0 0
        %1239 = vmatpush1.bf16.xpose.msra.mxu0 0
        %1240 = vmatprep.mubr.bf16.mxu0 0
        %1241 = vmatmul.mubr.bf16.gmra.mrb[0].mxu0 %v1203
        %v1242 = vpop.f32.mrb[0].mxu0
        %v1243 = vadd.f32 0.0, %v1242
        %v1244 = vpop.f32.mrb[0].mxu0
        %v1245 = vpop.f32.mrb[0].mxu0
        %v1246 = vpop.f32.mrb[0].mxu0
        %1247 = vdwg.mxu0
        %v1248 = vsel %vm801, %v1193, -1e+10
        %v1249 = vsel %vm802, %v1243, -1e+10
        %v1250 = vsel %vm695, %v1248, -inf
        %1251 = vmax.xlane.f32.xlu0 %v1250
        %v1252 = vpop.xlane.xlu0 %1251
        %v1253 = vsel %vm695, %v1249, -inf
        %1254 = vmax.xlane.f32.xlu0 %v1253
        %v1255 = vpop.xlane.xlu0 %1254
        %v1256 = vsub.f32 %v1248, %v1252
        %v1257 = vsub.f32 %v1249, %v1255
        %v1258 = vmul.f32 %v1256, 1.442695
        %v1259 = vpow.pop %v1258
        %v1260 = vmul.f32 %v1257, 1.442695
        %v1261 = vpow.pop %v1260
        %v1262 = vsel %vm695, %v1259, 0.0
        %1263 = vadd.xlane.f32.xlu0 %v1262
        %v1264 = vpop.xlane.xlu0 %1263
        %v1265 = vsel %vm695, %v1261, 0.0
        %1266 = vadd.xlane.f32.xlu0 %v1265
        %v1267 = vpop.xlane.xlu0 %1266
        %v1268 = vrcp.pop %v1264
        %v1269 = vrcp.pop %v1267
        %v1270 = vmul.f32 %v1259, %v1268
        %v1271 = vmul.f32 %v1261, %v1269
        %v1272 = vpack.c.bf16 %v1270, %v1270
        %v1273 = vpack.c.bf16 %v1271, %v1271
        %1274 = vrot.lane.b32.xlu0 %v690, 48
        %v1275 = vpop.permute.xlu0 %1274
        %v1277 = vsel %vm695, %v1272, 0
        %v1280 = vsel %vm834, %v1275, 0
        %1282 = vmatprep.subr.bf16.mxu0 0
        %1283 = vmatpush1.bf16.msra.mxu0 %v1280
        %1284 = vmatprep.subr.bf16.mxu0 0
        %1285 = vmatpush1.bf16.msra.mxu0 0
        %1286 = vmatprep.subr.bf16.mxu0 0
        %1287 = vmatpush1.bf16.msra.mxu0 0
        %1288 = vmatprep.subr.bf16.mxu0 0
        %1289 = vmatpush1.bf16.msra.mxu0 0
        %1290 = vmatprep.subr.bf16.mxu0 0
        %1291 = vmatpush1.bf16.msra.mxu0 0
        %1292 = vmatprep.subr.bf16.mxu0 0
        %1293 = vmatpush1.bf16.msra.mxu0 0
        %1294 = vmatprep.subr.bf16.mxu0 0
        %1295 = vmatpush1.bf16.msra.mxu0 0
        %1296 = vmatprep.subr.bf16.mxu0 0
        %1297 = vmatpush1.bf16.msra.mxu0 0
        %1298 = vmatprep.subr.bf16.mxu0 0
        %1299 = vmatpush1.bf16.msra.mxu0 0
        %1300 = vmatprep.subr.bf16.mxu0 0
        %1301 = vmatpush1.bf16.msra.mxu0 0
        %1302 = vmatprep.subr.bf16.mxu0 0
        %1303 = vmatpush1.bf16.msra.mxu0 0
        %1304 = vmatprep.subr.bf16.mxu0 0
        %1305 = vmatpush1.bf16.msra.mxu0 0
        %1306 = vmatprep.subr.bf16.mxu0 0
        %1307 = vmatpush1.bf16.msra.mxu0 0
        %1308 = vmatprep.subr.bf16.mxu0 0
        %1309 = vmatpush1.bf16.msra.mxu0 0
        %1310 = vmatprep.subr.bf16.mxu0 0
        %1311 = vmatpush1.bf16.msra.mxu0 0
        %1312 = vmatprep.subr.bf16.mxu0 0
        %1313 = vmatpush1.bf16.msra.mxu0 0
        %1314 = vmatprep.mubr.bf16.mxu0 0
        %1315 = vmatmul.mubr.bf16.gmra.mrb[0].mxu0 %v1277
        %v1316 = vpop.f32.mrb[0].mxu0
        %v1317 = vadd.f32 0.0, %v1316
        %v1318 = vpop.f32.mrb[0].mxu0
        %v1319 = vpop.f32.mrb[0].mxu0
        %v1320 = vpop.f32.mrb[0].mxu0
        %1321 = vdwg.mxu0
        %1322 = vrot.lane.b32.xlu0 %v691, 48
        %v1323 = vpop.permute.xlu0 %1322
        %v1325 = vsel %vm695, %v1273, 0
        %v1328 = vsel %vm834, %v1323, 0
        %1330 = vmatprep.subr.bf16.mxu0 0
        %1331 = vmatpush1.bf16.msra.mxu0 %v1328
        %1332 = vmatprep.subr.bf16.mxu0 0
        %1333 = vmatpush1.bf16.msra.mxu0 0
        %1334 = vmatprep.subr.bf16.mxu0 0
        %1335 = vmatpush1.bf16.msra.mxu0 0
        %1336 = vmatprep.subr.bf16.mxu0 0
        %1337 = vmatpush1.bf16.msra.mxu0 0
        %1338 = vmatprep.subr.bf16.mxu0 0
        %1339 = vmatpush1.bf16.msra.mxu0 0
        %1340 = vmatprep.subr.bf16.mxu0 0
        %1341 = vmatpush1.bf16.msra.mxu0 0
        %1342 = vmatprep.subr.bf16.mxu0 0
        %1343 = vmatpush1.bf16.msra.mxu0 0
        %1344 = vmatprep.subr.bf16.mxu0 0
        %1345 = vmatpush1.bf16.msra.mxu0 0
        %1346 = vmatprep.subr.bf16.mxu0 0
        %1347 = vmatpush1.bf16.msra.mxu0 0
        %1348 = vmatprep.subr.bf16.mxu0 0
        %1349 = vmatpush1.bf16.msra.mxu0 0
        %1350 = vmatprep.subr.bf16.mxu0 0
        %1351 = vmatpush1.bf16.msra.mxu0 0
        %1352 = vmatprep.subr.bf16.mxu0 0
        %1353 = vmatpush1.bf16.msra.mxu0 0
        %1354 = vmatprep.subr.bf16.mxu0 0
        %1355 = vmatpush1.bf16.msra.mxu0 0
        %1356 = vmatprep.subr.bf16.mxu0 0
        %1357 = vmatpush1.bf16.msra.mxu0 0
        %1358 = vmatprep.subr.bf16.mxu0 0
        %1359 = vmatpush1.bf16.msra.mxu0 0
        %1360 = vmatprep.subr.bf16.mxu0 0
        %1361 = vmatpush1.bf16.msra.mxu0 0
        %1362 = vmatprep.mubr.bf16.mxu0 0
        %1363 = vmatmul.mubr.bf16.gmra.mrb[0].mxu0 %v1325
        %v1364 = vpop.f32.mrb[0].mxu0
        %v1365 = vadd.f32 0.0, %v1364
        %v1366 = vpop.f32.mrb[0].mxu0
        %v1367 = vpop.f32.mrb[0].mxu0
        %v1368 = vpop.f32.mrb[0].mxu0
        %1369 = vdwg.mxu0
        %1370 = vrot.lane.b32.xlu0 %v690, 104
        %v1371 = vpop.permute.xlu0 %1370
        %1372 = vrot.lane.b32.xlu0 %v690, 72
        %v1373 = vpop.permute.xlu0 %1372
        %v1375 = vsel %vm695, %v1371, 0
        %v1378 = vsel %vm695, %v1373, 0
        %1380 = vmatprep.subr.bf16.mxu0 0
        %1381 = vmatpush1.bf16.xpose.msra.mxu0 %v1378
        %1382 = vmatprep.subr.bf16.mxu0 0
        %1383 = vmatpush1.bf16.xpose.msra.mxu0 0
        %1384 = vmatprep.subr.bf16.mxu0 0
        %1385 = vmatpush1.bf16.xpose.msra.mxu0 0
        %1386 = vmatprep.subr.bf16.mxu0 0
        %1387 = vmatpush1.bf16.xpose.msra.mxu0 0
        %1388 = vmatprep.subr.bf16.mxu0 0
        %1389 = vmatpush1.bf16.xpose.msra.mxu0 0
        %1390 = vmatprep.subr.bf16.mxu0 0
        %1391 = vmatpush1.bf16.xpose.msra.mxu0 0
        %1392 = vmatprep.subr.bf16.mxu0 0
        %1393 = vmatpush1.bf16.xpose.msra.mxu0 0
        %1394 = vmatprep.subr.bf16.mxu0 0
        %1395 = vmatpush1.bf16.xpose.msra.mxu0 0
        %1396 = vmatprep.subr.bf16.mxu0 0
        %1397 = vmatpush1.bf16.xpose.msra.mxu0 0
        %1398 = vmatprep.subr.bf16.mxu0 0
        %1399 = vmatpush1.bf16.xpose.msra.mxu0 0
        %1400 = vmatprep.subr.bf16.mxu0 0
        %1401 = vmatpush1.bf16.xpose.msra.mxu0 0
        %1402 = vmatprep.subr.bf16.mxu0 0
        %1403 = vmatpush1.bf16.xpose.msra.mxu0 0
        %1404 = vmatprep.subr.bf16.mxu0 0
        %1405 = vmatpush1.bf16.xpose.msra.mxu0 0
        %1406 = vmatprep.subr.bf16.mxu0 0
        %1407 = vmatpush1.bf16.xpose.msra.mxu0 0
        %1408 = vmatprep.subr.bf16.mxu0 0
        %1409 = vmatpush1.bf16.xpose.msra.mxu0 0
        %1410 = vmatprep.subr.bf16.mxu0 0
        %1411 = vmatpush1.bf16.xpose.msra.mxu0 0
        %1412 = vmatprep.mubr.bf16.mxu0 0
        %1413 = vmatmul.mubr.bf16.gmra.mrb[0].mxu0 %v1375
        %v1414 = vpop.f32.mrb[0].mxu0
        %v1415 = vadd.f32 0.0, %v1414
        %v1416 = vpop.f32.mrb[0].mxu0
        %v1417 = vpop.f32.mrb[0].mxu0
        %v1418 = vpop.f32.mrb[0].mxu0
        %1419 = vdwg.mxu0
        %1420 = vrot.lane.b32.xlu0 %v691, 104
        %v1421 = vpop.permute.xlu0 %1420
        %1422 = vrot.lane.b32.xlu0 %v691, 72
        %v1423 = vpop.permute.xlu0 %1422
        %v1425 = vsel %vm695, %v1421, 0
        %v1428 = vsel %vm695, %v1423, 0
        %1430 = vmatprep.subr.bf16.mxu0 0
        %1431 = vmatpush1.bf16.xpose.msra.mxu0 %v1428
        %1432 = vmatprep.subr.bf16.mxu0 0
        %1433 = vmatpush1.bf16.xpose.msra.mxu0 0
        %1434 = vmatprep.subr.bf16.mxu0 0
        %1435 = vmatpush1.bf16.xpose.msra.mxu0 0
        %1436 = vmatprep.subr.bf16.mxu0 0
        %1437 = vmatpush1.bf16.xpose.msra.mxu0 0
        %1438 = vmatprep.subr.bf16.mxu0 0
        %1439 = vmatpush1.bf16.xpose.msra.mxu0 0
        %1440 = vmatprep.subr.bf16.mxu0 0
        %1441 = vmatpush1.bf16.xpose.msra.mxu0 0
        %1442 = vmatprep.subr.bf16.mxu0 0
        %1443 = vmatpush1.bf16.xpose.msra.mxu0 0
        %1444 = vmatprep.subr.bf16.mxu0 0
        %1445 = vmatpush1.bf16.xpose.msra.mxu0 0
        %1446 = vmatprep.subr.bf16.mxu0 0
        %1447 = vmatpush1.bf16.xpose.msra.mxu0 0
        %1448 = vmatprep.subr.bf16.mxu0 0
        %1449 = vmatpush1.bf16.xpose.msra.mxu0 0
        %1450 = vmatprep.subr.bf16.mxu0 0
        %1451 = vmatpush1.bf16.xpose.msra.mxu0 0
        %1452 = vmatprep.subr.bf16.mxu0 0
        %1453 = vmatpush1.bf16.xpose.msra.mxu0 0
        %1454 = vmatprep.subr.bf16.mxu0 0
        %1455 = vmatpush1.bf16.xpose.msra.mxu0 0
        %1456 = vmatprep.subr.bf16.mxu0 0
        %1457 = vmatpush1.bf16.xpose.msra.mxu0 0
        %1458 = vmatprep.subr.bf16.mxu0 0
        %1459 = vmatpush1.bf16.xpose.msra.mxu0 0
        %1460 = vmatprep.subr.bf16.mxu0 0
        %1461 = vmatpush1.bf16.xpose.msra.mxu0 0
        %1462 = vmatprep.mubr.bf16.mxu0 0
        %1463 = vmatmul.mubr.bf16.gmra.mrb[0].mxu0 %v1425
        %v1464 = vpop.f32.mrb[0].mxu0
        %v1465 = vadd.f32 0.0, %v1464
        %v1466 = vpop.f32.mrb[0].mxu0
        %v1467 = vpop.f32.mrb[0].mxu0
        %v1468 = vpop.f32.mrb[0].mxu0
        %1469 = vdwg.mxu0
        %v1470 = vsel %vm801, %v1415, -1e+10
        %v1471 = vsel %vm802, %v1465, -1e+10
        %v1472 = vsel %vm695, %v1470, -inf
        %1473 = vmax.xlane.f32.xlu0 %v1472
        %v1474 = vpop.xlane.xlu0 %1473
        %v1475 = vsel %vm695, %v1471, -inf
        %1476 = vmax.xlane.f32.xlu0 %v1475
        %v1477 = vpop.xlane.xlu0 %1476
        %v1478 = vsub.f32 %v1470, %v1474
        %v1479 = vsub.f32 %v1471, %v1477
        %v1480 = vmul.f32 %v1478, 1.442695
        %v1481 = vpow.pop %v1480
        %v1482 = vmul.f32 %v1479, 1.442695
        %v1483 = vpow.pop %v1482
        %v1484 = vsel %vm695, %v1481, 0.0
        %1485 = vadd.xlane.f32.xlu0 %v1484
        %v1486 = vpop.xlane.xlu0 %1485
        %v1487 = vsel %vm695, %v1483, 0.0
        %1488 = vadd.xlane.f32.xlu0 %v1487
        %v1489 = vpop.xlane.xlu0 %1488
        %v1490 = vrcp.pop %v1486
        %v1491 = vrcp.pop %v1489
        %v1492 = vmul.f32 %v1481, %v1490
        %v1493 = vmul.f32 %v1483, %v1491
        %v1494 = vpack.c.bf16 %v1492, %v1492
        %v1495 = vpack.c.bf16 %v1493, %v1493
        %1496 = vrot.lane.b32.xlu0 %v690, 40
        %v1497 = vpop.permute.xlu0 %1496
        %v1499 = vsel %vm695, %v1494, 0
        %v1502 = vsel %vm834, %v1497, 0
        %1504 = vmatprep.subr.bf16.mxu0 0
        %1505 = vmatpush1.bf16.msra.mxu0 %v1502
        %1506 = vmatprep.subr.bf16.mxu0 0
        %1507 = vmatpush1.bf16.msra.mxu0 0
        %1508 = vmatprep.subr.bf16.mxu0 0
        %1509 = vmatpush1.bf16.msra.mxu0 0
        %1510 = vmatprep.subr.bf16.mxu0 0
        %1511 = vmatpush1.bf16.msra.mxu0 0
        %1512 = vmatprep.subr.bf16.mxu0 0
        %1513 = vmatpush1.bf16.msra.mxu0 0
        %1514 = vmatprep.subr.bf16.mxu0 0
        %1515 = vmatpush1.bf16.msra.mxu0 0
        %1516 = vmatprep.subr.bf16.mxu0 0
        %1517 = vmatpush1.bf16.msra.mxu0 0
        %1518 = vmatprep.subr.bf16.mxu0 0
        %1519 = vmatpush1.bf16.msra.mxu0 0
        %1520 = vmatprep.subr.bf16.mxu0 0
        %1521 = vmatpush1.bf16.msra.mxu0 0
        %1522 = vmatprep.subr.bf16.mxu0 0
        %1523 = vmatpush1.bf16.msra.mxu0 0
        %1524 = vmatprep.subr.bf16.mxu0 0
        %1525 = vmatpush1.bf16.msra.mxu0 0
        %1526 = vmatprep.subr.bf16.mxu0 0
        %1527 = vmatpush1.bf16.msra.mxu0 0
        %1528 = vmatprep.subr.bf16.mxu0 0
        %1529 = vmatpush1.bf16.msra.mxu0 0
        %1530 = vmatprep.subr.bf16.mxu0 0
        %1531 = vmatpush1.bf16.msra.mxu0 0
        %1532 = vmatprep.subr.bf16.mxu0 0
        %1533 = vmatpush1.bf16.msra.mxu0 0
        %1534 = vmatprep.subr.bf16.mxu0 0
        %1535 = vmatpush1.bf16.msra.mxu0 0
        %1536 = vmatprep.mubr.bf16.mxu0 0
        %1537 = vmatmul.mubr.bf16.gmra.mrb[0].mxu0 %v1499
        %v1538 = vpop.f32.mrb[0].mxu0
        %v1539 = vadd.f32 0.0, %v1538
        %v1540 = vpop.f32.mrb[0].mxu0
        %v1541 = vpop.f32.mrb[0].mxu0
        %v1542 = vpop.f32.mrb[0].mxu0
        %1543 = vdwg.mxu0
        %1544 = vrot.lane.b32.xlu0 %v691, 40
        %v1545 = vpop.permute.xlu0 %1544
        %v1547 = vsel %vm695, %v1495, 0
        %v1550 = vsel %vm834, %v1545, 0
        %1552 = vmatprep.subr.bf16.mxu0 0
        %1553 = vmatpush1.bf16.msra.mxu0 %v1550
        %1554 = vmatprep.subr.bf16.mxu0 0
        %1555 = vmatpush1.bf16.msra.mxu0 0
        %1556 = vmatprep.subr.bf16.mxu0 0
        %1557 = vmatpush1.bf16.msra.mxu0 0
        %1558 = vmatprep.subr.bf16.mxu0 0
        %1559 = vmatpush1.bf16.msra.mxu0 0
        %1560 = vmatprep.subr.bf16.mxu0 0
        %1561 = vmatpush1.bf16.msra.mxu0 0
        %1562 = vmatprep.subr.bf16.mxu0 0
        %1563 = vmatpush1.bf16.msra.mxu0 0
        %1564 = vmatprep.subr.bf16.mxu0 0
        %1565 = vmatpush1.bf16.msra.mxu0 0
        %1566 = vmatprep.subr.bf16.mxu0 0
        %1567 = vmatpush1.bf16.msra.mxu0 0
        %1568 = vmatprep.subr.bf16.mxu0 0
        %1569 = vmatpush1.bf16.msra.mxu0 0
        %1570 = vmatprep.subr.bf16.mxu0 0
        %1571 = vmatpush1.bf16.msra.mxu0 0
        %1572 = vmatprep.subr.bf16.mxu0 0
        %1573 = vmatpush1.bf16.msra.mxu0 0
        %1574 = vmatprep.subr.bf16.mxu0 0
        %1575 = vmatpush1.bf16.msra.mxu0 0
        %1576 = vmatprep.subr.bf16.mxu0 0
        %1577 = vmatpush1.bf16.msra.mxu0 0
        %1578 = vmatprep.subr.bf16.mxu0 0
        %1579 = vmatpush1.bf16.msra.mxu0 0
        %1580 = vmatprep.subr.bf16.mxu0 0
        %1581 = vmatpush1.bf16.msra.mxu0 0
        %1582 = vmatprep.subr.bf16.mxu0 0
        %1583 = vmatpush1.bf16.msra.mxu0 0
        %1584 = vmatprep.mubr.bf16.mxu0 0
        %1585 = vmatmul.mubr.bf16.gmra.mrb[0].mxu0 %v1547
        %v1586 = vpop.f32.mrb[0].mxu0
        %v1587 = vadd.f32 0.0, %v1586
        %v1588 = vpop.f32.mrb[0].mxu0
        %v1589 = vpop.f32.mrb[0].mxu0
        %v1590 = vpop.f32.mrb[0].mxu0
        %1591 = vdwg.mxu0
        %1594 = vrot.lane.b32.xlu0 %v1095, 8
        %v1595 = vpop.permute.xlu0 %1594
        %1596 = vrot.lane.b32.xlu0 %v1143, 8
        %v1597 = vpop.permute.xlu0 %1596
        %1602 = vrot.lane.b32.xlu0 %v1317, 16
        %v1603 = vpop.permute.xlu0 %1602
        %1604 = vrot.lane.b32.xlu0 %v1365, 16
        %v1605 = vpop.permute.xlu0 %1604
        %1610 = vrot.lane.b32.xlu0 %v1539, 24
        %v1611 = vpop.permute.xlu0 %1610
        %1612 = vrot.lane.b32.xlu0 %v1587, 24
        %v1613 = vpop.permute.xlu0 %1612
        %v1616 = vsel %vm695, %v873, %v1595
        %v1617 = vsel %vm695, %v921, %v1597
        %vm1618 = vcmask 130048
        %v1619 = vsel %vm1618, %v1616, %v1603
        %v1620 = vsel %vm1618, %v1617, %v1605
        %vm1621 = vcmask 195584
        %v1622 = vsel %vm1621, %v1619, %v1611
        %v1623 = vsel %vm1621, %v1620, %v1613
        %v1624 = vpack.c.bf16 %v1623, %v1622
        %v1625 = vld [vmem:[%s578] sm:$0xf]
        %v1626 = vld [vmem:[%s578 + $0x4] sm:$0xf]
        %v1627 = vld [vmem:[%s578 + $0x8] sm:$0xf]
        %v1628 = vld [vmem:[%s578 + $0xc] sm:$0xf]
        %v1629 = vld [vmem:[%s581] sm:$0x1]
        %v1631 = vlaneseq
        %v1632 = vshrl.u32 %v1631, 7
        %v1633 = vsub.s32 0, %v1632
        %v1634 = vrot.slane %v1629, %v1633
        %v1640 = vunpack.c.l.b16 %v1625
        %v1641 = vunpack.c.l.b16 %v1626
        %v1642 = vunpack.c.l.b16 %v1627
        %v1643 = vunpack.c.l.b16 %v1628
        %v1644 = vpack.c.b16 %v1641, %v1640
        %v1645 = vpack.c.b16 %v1643, %v1642
        %v1649 = vsel %vm641, %v1624, 0
        %1651 = vmatprep.subr.bf16.mxu0 0
        %1652 = vmatpush1.bf16.msra.mxu0 %v1644
        %1653 = vmatprep.subr.bf16.mxu0 0
        %1654 = vmatpush1.bf16.msra.mxu0 %v1645
        %1655 = vmatprep.subr.bf16.mxu0 0
        %1656 = vmatpush1.bf16.msra.mxu0 0
        %1657 = vmatprep.subr.bf16.mxu0 0
        %1658 = vmatpush1.bf16.msra.mxu0 0
        %1659 = vmatprep.subr.bf16.mxu0 0
        %1660 = vmatpush1.bf16.msra.mxu0 0
        %1661 = vmatprep.subr.bf16.mxu0 0
        %1662 = vmatpush1.bf16.msra.mxu0 0
        %1663 = vmatprep.subr.bf16.mxu0 0
        %1664 = vmatpush1.bf16.msra.mxu0 0
        %1665 = vmatprep.subr.bf16.mxu0 0
        %1666 = vmatpush1.bf16.msra.mxu0 0
        %1667 = vmatprep.subr.bf16.mxu0 0
        %1668 = vmatpush1.bf16.msra.mxu0 0
        %1669 = vmatprep.subr.bf16.mxu0 0
        %1670 = vmatpush1.bf16.msra.mxu0 0
        %1671 = vmatprep.subr.bf16.mxu0 0
        %1672 = vmatpush1.bf16.msra.mxu0 0
        %1673 = vmatprep.subr.bf16.mxu0 0
        %1674 = vmatpush1.bf16.msra.mxu0 0
        %1675 = vmatprep.subr.bf16.mxu0 0
        %1676 = vmatpush1.bf16.msra.mxu0 0
        %1677 = vmatprep.subr.bf16.mxu0 0
        %1678 = vmatpush1.bf16.msra.mxu0 0
        %1679 = vmatprep.subr.bf16.mxu0 0
        %1680 = vmatpush1.bf16.msra.mxu0 0
        %1681 = vmatprep.subr.bf16.mxu0 0
        %1682 = vmatpush1.bf16.msra.mxu0 0
        %1683 = vmatprep.mubr.bf16.mxu0 0
        %1684 = vmatmul.mubr.bf16.gmra.mrb[0].mxu0 %v1649
        %v1685 = vpop.f32.mrb[0].mxu0
        %v1686 = vadd.f32 %v1634, %v1685
        %v1687 = vpop.f32.mrb[0].mxu0
        %v1688 = vpop.f32.mrb[0].mxu0
        %v1689 = vadd.f32 %v1634, %v1688
        %v1690 = vpop.f32.mrb[0].mxu0
        %1691 = vdwg.mxu0
        %v1692 = vld [vmem:[%s600] sm:$0x1]
        %v1693 = vld [vmem:[%s603] sm:$0x1]
        %v1694 = vadd.f32 %v615, %v1686
        %v1695 = vadd.f32 %v616, %v1689
        %v1696 = vsel %vm641, %v1694, 0.0
        %1697 = vadd.xlane.f32.xlu0 %v1696
        %v1698 = vpop.xlane.xlu0 %1697
        %v1699 = vsel %vm641, %v1695, 0.0
        %1700 = vadd.xlane.f32.xlu0 %v1699
        %v1701 = vpop.xlane.xlu0 %1700
        %v1702 = vrcp.pop 32.0
        %v1703 = vmul.f32 %v1698, %v1702
        %v1704 = vmul.f32 %v1701, %v1702
        %v1705 = vsub.f32 %v1694, %v1703
        %v1706 = vsub.f32 %v1695, %v1704
        %v1707 = vmul.f32 %v1705, %v1705
        %v1708 = vmul.f32 %v1706, %v1706
        %v1709 = vsel %vm641, %v1707, 0.0
        %1710 = vadd.xlane.f32.xlu0 %v1709
        %v1711 = vpop.xlane.xlu0 %1710
        %v1712 = vsel %vm641, %v1708, 0.0
        %1713 = vadd.xlane.f32.xlu0 %v1712
        %v1714 = vpop.xlane.xlu0 %1713
        %v1715 = vmul.f32 %v1711, %v1702
        %v1716 = vmul.f32 %v1714, %v1702
        %v1717 = vadd.f32 %v1715, 1e-05
        %v1718 = vadd.f32 %v1716, 1e-05
        %v1719 = vrsqrt.pop %v1717
        %v1720 = vrsqrt.pop %v1718
        %v1721 = vmul.f32 %v1705, %v1719
        %v1722 = vmul.f32 %v1706, %v1720
        %v1724 = vlaneseq
        %v1725 = vshrl.u32 %v1724, 7
        %v1726 = vsub.s32 0, %v1725
        %v1727 = vrot.slane %v1692, %v1726
        %v1729 = vmul.f32 %v1721, %v1727
        %v1730 = vmul.f32 %v1722, %v1727
        %v1732 = vlaneseq
        %v1733 = vshrl.u32 %v1732, 7
        %v1734 = vsub.s32 0, %v1733
        %v1735 = vrot.slane %v1693, %v1734
        %v1737 = vadd.f32 %v1729, %v1735
        %v1738 = vadd.f32 %v1730, %v1735
        %v1739 = vpack.c.bf16 %v1738, %v1737
        %v1740 = vld [vmem:[%s586] sm:$0xf]
        %v1741 = vld [vmem:[%s586 + $0x4] sm:$0xf]
        %v1742 = vld [vmem:[%s586 + $0x8] sm:$0xf]
        %v1743 = vld [vmem:[%s586 + $0xc] sm:$0xf]
        %v1744 = vld [vmem:[%s589] sm:$0x1]
        %v1746 = vlaneseq
        %v1747 = vshrl.u32 %v1746, 7
        %v1748 = vsub.s32 0, %v1747
        %v1749 = vrot.slane %v1744, %v1748
        %v1755 = vunpack.c.l.b16 %v1740
        %v1756 = vunpack.c.l.b16 %v1741
        %v1757 = vunpack.c.l.b16 %v1742
        %v1758 = vunpack.c.l.b16 %v1743
        %v1759 = vpack.c.b16 %v1756, %v1755
        %v1760 = vpack.c.b16 %v1758, %v1757
        %v1764 = vsel %vm641, %v1739, 0
        %1766 = vmatprep.subr.bf16.mxu0 0
        %1767 = vmatpush1.bf16.msra.mxu0 %v1759
        %1768 = vmatprep.subr.bf16.mxu0 0
        %1769 = vmatpush1.bf16.msra.mxu0 %v1760
        %1770 = vmatprep.subr.bf16.mxu0 0
        %1771 = vmatpush1.bf16.msra.mxu0 0
        %1772 = vmatprep.subr.bf16.mxu0 0
        %1773 = vmatpush1.bf16.msra.mxu0 0
        %1774 = vmatprep.subr.bf16.mxu0 0
        %1775 = vmatpush1.bf16.msra.mxu0 0
        %1776 = vmatprep.subr.bf16.mxu0 0
        %1777 = vmatpush1.bf16.msra.mxu0 0
        %1778 = vmatprep.subr.bf16.mxu0 0
        %1779 = vmatpush1.bf16.msra.mxu0 0
        %1780 = vmatprep.subr.bf16.mxu0 0
        %1781 = vmatpush1.bf16.msra.mxu0 0
        %1782 = vmatprep.subr.bf16.mxu0 0
        %1783 = vmatpush1.bf16.msra.mxu0 0
        %1784 = vmatprep.subr.bf16.mxu0 0
        %1785 = vmatpush1.bf16.msra.mxu0 0
        %1786 = vmatprep.subr.bf16.mxu0 0
        %1787 = vmatpush1.bf16.msra.mxu0 0
        %1788 = vmatprep.subr.bf16.mxu0 0
        %1789 = vmatpush1.bf16.msra.mxu0 0
        %1790 = vmatprep.subr.bf16.mxu0 0
        %1791 = vmatpush1.bf16.msra.mxu0 0
        %1792 = vmatprep.subr.bf16.mxu0 0
        %1793 = vmatpush1.bf16.msra.mxu0 0
        %1794 = vmatprep.subr.bf16.mxu0 0
        %1795 = vmatpush1.bf16.msra.mxu0 0
        %1796 = vmatprep.subr.bf16.mxu0 0
        %1797 = vmatpush1.bf16.msra.mxu0 0
        %1798 = vmatprep.mubr.bf16.mxu0 0
        %1799 = vmatmul.mubr.bf16.gmra.mrb[0].mxu0 %v1764
        %v1800 = vpop.f32.mrb[0].mxu0
        %v1801 = vadd.f32 %v1749, %v1800
        %v1802 = vpop.f32.mrb[0].mxu0
        %v1803 = vpop.f32.mrb[0].mxu0
        %v1804 = vadd.f32 %v1749, %v1803
        %v1805 = vpop.f32.mrb[0].mxu0
        %1806 = vdwg.mxu0
        %v1807 = vmax.f32 %v1801, 0.0
        %v1808 = vmax.f32 %v1804, 0.0
        %v1809 = vpack.c.bf16 %v1808, %v1807
        %v1810 = vld [vmem:[%s594] sm:$0xf]
        %v1811 = vld [vmem:[%s594 + $0x4] sm:$0xf]
        %v1812 = vld [vmem:[%s594 + $0x8] sm:$0xf]
        %v1813 = vld [vmem:[%s594 + $0xc] sm:$0xf]
        %v1814 = vld [vmem:[%s594 + $0x10] sm:$0xf]
        %v1815 = vld [vmem:[%s594 + $0x14] sm:$0xf]
        %v1816 = vld [vmem:[%s594 + $0x18] sm:$0xf]
        %v1817 = vld [vmem:[%s594 + $0x1c] sm:$0xf]
        %v1818 = vld [vmem:[%s597] sm:$0x1]
        %v1820 = vlaneseq
        %v1821 = vshrl.u32 %v1820, 7
        %v1822 = vsub.s32 0, %v1821
        %v1823 = vrot.slane %v1818, %v1822
        %v1833 = vunpack.c.l.b16 %v1810
        %v1834 = vunpack.c.l.b16 %v1811
        %v1835 = vunpack.c.l.b16 %v1812
        %v1836 = vunpack.c.l.b16 %v1813
        %v1837 = vunpack.c.l.b16 %v1814
        %v1838 = vunpack.c.l.b16 %v1815
        %v1839 = vunpack.c.l.b16 %v1816
        %v1840 = vunpack.c.l.b16 %v1817
        %v1841 = vpack.c.b16 %v1834, %v1833
        %v1842 = vpack.c.b16 %v1836, %v1835
        %v1843 = vpack.c.b16 %v1838, %v1837
        %v1844 = vpack.c.b16 %v1840, %v1839
        %vm1849 = vcmask 523264
        %v1851 = vsel %vm1849, %v1809, 0
        %1853 = vmatprep.subr.bf16.mxu0 0
        %1854 = vmatpush1.bf16.msra.mxu0 %v1841
        %1855 = vmatprep.subr.bf16.mxu0 0
        %1856 = vmatpush1.bf16.msra.mxu0 %v1842
        %1857 = vmatprep.subr.bf16.mxu0 0
        %1858 = vmatpush1.bf16.msra.mxu0 %v1843
        %1859 = vmatprep.subr.bf16.mxu0 0
        %1860 = vmatpush1.bf16.msra.mxu0 %v1844
        %1861 = vmatprep.subr.bf16.mxu0 0
        %1862 = vmatpush1.bf16.msra.mxu0 0
        %1863 = vmatprep.subr.bf16.mxu0 0
        %1864 = vmatpush1.bf16.msra.mxu0 0
        %1865 = vmatprep.subr.bf16.mxu0 0
        %1866 = vmatpush1.bf16.msra.mxu0 0
        %1867 = vmatprep.subr.bf16.mxu0 0
        %1868 = vmatpush1.bf16.msra.mxu0 0
        %1869 = vmatprep.subr.bf16.mxu0 0
        %1870 = vmatpush1.bf16.msra.mxu0 0
        %1871 = vmatprep.subr.bf16.mxu0 0
        %1872 = vmatpush1.bf16.msra.mxu0 0
        %1873 = vmatprep.subr.bf16.mxu0 0
        %1874 = vmatpush1.bf16.msra.mxu0 0
        %1875 = vmatprep.subr.bf16.mxu0 0
        %1876 = vmatpush1.bf16.msra.mxu0 0
        %1877 = vmatprep.subr.bf16.mxu0 0
        %1878 = vmatpush1.bf16.msra.mxu0 0
        %1879 = vmatprep.subr.bf16.mxu0 0
        %1880 = vmatpush1.bf16.msra.mxu0 0
        %1881 = vmatprep.subr.bf16.mxu0 0
        %1882 = vmatpush1.bf16.msra.mxu0 0
        %1883 = vmatprep.subr.bf16.mxu0 0
        %1884 = vmatpush1.bf16.msra.mxu0 0
        %1885 = vmatprep.mubr.bf16.mxu0 0
        %1886 = vmatmul.mubr.bf16.gmra.mrb[0].mxu0 %v1851
        %v1887 = vpop.f32.mrb[0].mxu0
        %v1888 = vadd.f32 %v1823, %v1887
        %v1889 = vpop.f32.mrb[0].mxu0
        %v1890 = vpop.f32.mrb[0].mxu0
        %v1891 = vadd.f32 %v1823, %v1890
        %v1892 = vpop.f32.mrb[0].mxu0
        %1893 = vdwg.mxu0
        %v1894 = vadd.f32 %v1737, %v1888
        %v1895 = vadd.f32 %v1738, %v1891
        %v1896 = vsel %vm641, %v1894, 0.0
        %1897 = vadd.xlane.f32.xlu0 %v1896
        %v1898 = vpop.xlane.xlu0 %1897
        %v1899 = vsel %vm641, %v1895, 0.0
        %1900 = vadd.xlane.f32.xlu0 %v1899
        %v1901 = vpop.xlane.xlu0 %1900
        %v1902 = vmul.f32 %v1898, %v1702
        %v1903 = vmul.f32 %v1901, %v1702
        %v1904 = vsub.f32 %v1894, %v1902
        %v1905 = vsub.f32 %v1895, %v1903
        %v1906 = vmul.f32 %v1904, %v1904
        %v1907 = vmul.f32 %v1905, %v1905
        %v1908 = vsel %vm641, %v1906, 0.0
        %1909 = vadd.xlane.f32.xlu0 %v1908
        %v1910 = vpop.xlane.xlu0 %1909
        %v1911 = vsel %vm641, %v1907, 0.0
        %1912 = vadd.xlane.f32.xlu0 %v1911
        %v1913 = vpop.xlane.xlu0 %1912
        %v1914 = vmul.f32 %v1910, %v1702
        %v1915 = vmul.f32 %v1913, %v1702
        %v1916 = vadd.f32 %v1914, 1e-05
        %v1917 = vadd.f32 %v1915, 1e-05
        %v1918 = vrsqrt.pop %v1916
        %v1919 = vrsqrt.pop %v1917
        %v1920 = vmul.f32 %v1904, %v1918
        %v1921 = vmul.f32 %v1905, %v1919
        %v1922 = vmul.f32 %v1920, %v1727
        %v1923 = vmul.f32 %v1921, %v1727
        %v1924 = vadd.f32 %v1922, %v1735
        %v1925 = vadd.f32 %v1923, %v1735
        %1926 = vst.msk [vmem:[#allocation5] sm:$0xff] %vm641, %v1924
        %1927 = vst.msk [vmem:[#allocation5 + $0x8] sm:$0xff] %vm641, %v1925
        // Predicated region
        $region77: #{tpu_custom_call.1} parent=67 // pred_check
          %p1928 = pneg %p367
        $region78: #{tpu_custom_call.1} parent=67 // pred_check_branch
          %1930 = sbr.rel (%p1928) target = $region80
        $region79: #{tpu_custom_call.1} parent=67 // pred_region
          %s1931 = smul.u32 2, %s29
          %s1933 = ssub.s32 256, 256
          %1934 = vsyncadd [#allocation4], %s1933
          %s1935 = smul.addr %s1931, 128
          %s1936 = scalar_lea.hbm %s12, %s1935
          %s1937 = sshll.u32 [#allocation5], 4
          %s1938 = int_to_ptr.vmem [resolvable:$true] %s1937
          %1943 = dma.vmem_to_hbm [thread:$0]  %s1938, 256, %s1936, [#allocation4], 128, 128, 8
        $region80: #{tpu_custom_call.1} parent=67 // pred_fallthru
          _
        // Predicated region
        $region81: #{tpu_custom_call.1} parent=67 // pred_check
          %p1944 = pneg %p367
        $region82: #{tpu_custom_call.1} parent=67 // pred_check_branch
          %1946 = sbr.rel (%p1944) target = $region84
        $region83: #{tpu_custom_call.1} parent=67 // pred_region
          %1947 = dma.done [#allocation4], 256
        $region84: #{tpu_custom_call.1} parent=67 // pred_fallthru
          _
      $region68: #{tpu_custom_call.1} parent=5 // pred_fallthru
        _
      %p1948 = scmp.le.s32.totalorder 2, %s20
      // Predicated region
      $region85: #{tpu_custom_call.1} parent=5 // pred_check
        %p1949 = pneg %p1948
      $region86: #{tpu_custom_call.1} parent=5 // pred_check_branch
        %1951 = sbr.rel (%p1949) target = $region88
      $region87: #{tpu_custom_call.1} parent=5 // pred_region
        %s1952 = ssub.s32 %s20, 2
      $region88: #{tpu_custom_call.1} parent=5 // pred_fallthru
        _
    $region6: #{tpu_custom_call.1} parent=1 // loop_footer
      %s24 = sadd.s32 1, %s20
    $region7: #{tpu_custom_call.1} parent=1 // loop_footer_branch
      %19 = sbr.rel target = $region3
    $region8: #{tpu_custom_call.1} parent=1 // loop_exit
      _
    %1953 = vsyncpa [#allocation3], 1
    %s1954 = scalar_lea.sflag [#allocation3], 1
    %1955 = vsyncpa %s1954, 1
    %1956 = vsyncpa [#allocation4], 1
    %s1957 = scalar_lea.sflag [#allocation4], 1
    %1958 = vsyncpa %s1957, 1

</llo_original>
